<compile_context>
chip_gen: v7x
topology: tpu7x:2x2x1
jax: 0.10.0
libtpu: 0.0.40
codegen_flags: <defaults>
</compile_context>

<pallas_src>
import jax
import jax.numpy as jnp
from jax import lax
from jax.experimental import pallas as pl
from jax.experimental.pallas import tpu as pltpu

EPS = 1e-5


def _resblock_kernel(x_ref, w1_ref, g1_ref, be1_ref, w2_ref, g2_ref, be2_ref,
                     o_ref, acc_ref):
    j = pl.program_id(0)
    inv_b = 1.0 / x_ref.shape[0]

    @pl.when(j == 0)
    def _():
        acc_ref[...] = jnp.zeros_like(acc_ref)

    x = x_ref[...]                                      # (B, D) f32, VMEM-resident

    # fc1 column tile: (B, D) @ (D, TN) -> (B, TN), f32 accumulation on the MXU.
    h1 = jnp.dot(x.astype(jnp.bfloat16), w1_ref[...],
                 preferred_element_type=jnp.float32)

    # bn1 (training mode, biased variance) folded into one scale/shift.
    m1 = jnp.sum(h1, axis=0, keepdims=True) * inv_b
    v1 = jnp.maximum(jnp.sum(h1 * h1, axis=0, keepdims=True) * inv_b - m1 * m1, 0.0)
    scale1 = g1_ref[...] * lax.rsqrt(v1 + EPS)
    shift1 = be1_ref[...] - m1 * scale1
    a1 = jnp.maximum(h1 * scale1 + shift1, 0.0)         # ReLU

    # fc2 partial contraction over this feature tile: (B, TN) @ (TN, D).
    acc_ref[...] += jnp.dot(a1.astype(jnp.bfloat16), w2_ref[...],
                            preferred_element_type=jnp.float32)

    # Finalize: bn2 (folded) + residual + ReLU, single lane-dense writeback.
    @pl.when(j == pl.num_programs(0) - 1)
    def _():
        h2 = acc_ref[...]
        m2 = jnp.sum(h2, axis=0, keepdims=True) * inv_b
        v2 = jnp.maximum(jnp.sum(h2 * h2, axis=0, keepdims=True) * inv_b - m2 * m2, 0.0)
        scale2 = g2_ref[...] * lax.rsqrt(v2 + EPS)
        shift2 = be2_ref[...] - m2 * scale2
        o_ref[...] = jnp.maximum(h2 * scale2 + shift2 + x, 0.0).astype(o_ref.dtype)


def _pick_tile(dim):
    for tn in (256, 128):          # lane-dense; 256 keeps VMEM pressure modest on v7x
        if dim % tn == 0:
            return tn
    return dim                     # small / odd D: one full-width block


@jax.jit
def resblock_forward(x, params):
    """x: (B, D) float32. params: fc1/fc2 weights + bn1/bn2 gamma/beta.
    Linear biases are accepted in `params` but not used (BN mean-subtraction cancels them)."""
    B, D = x.shape
    tn = _pick_tile(D)
    n_tiles = D // tn

    # PyTorch Linear stores W as (out, in); kernel consumes (in, out). bf16 halves the
    # dominant cost (weight HBM bytes); the MXU still accumulates in f32.
    w1_t = params["w1"].T.astype(jnp.bfloat16)
    w2_t = params["w2"].T.astype(jnp.bfloat16)
    g1 = params["g1"].reshape(1, D).astype(jnp.float32)
    be1 = params["be1"].reshape(1, D).astype(jnp.float32)
    g2 = params["g2"].reshape(1, D).astype(jnp.float32)
    be2 = params["be2"].reshape(1, D).astype(jnp.float32)

    # Rough VMEM budget: resident x/out/acc (f32) + double-buffered bf16 weight tiles.
    vmem_need = 3 * B * D * 4 + 2 * 2 * (D * tn * 2) + 4 * 8 * D * 4
    vmem_limit = int(max(32 * 1024 * 1024, 1.5 * vmem_need))

    return pl.pallas_call(
        _resblock_kernel,
        out_shape=jax.ShapeDtypeStruct((B, D), x.dtype),
        grid=(n_tiles,),
        in_specs=[
            pl.BlockSpec((B, D), lambda j: (0, 0)),      # x       (resident)
            pl.BlockSpec((D, tn), lambda j: (0, j)),     # w1_t    column tile
            pl.BlockSpec((1, tn), lambda j: (0, j)),     # gamma1  column tile
            pl.BlockSpec((1, tn), lambda j: (0, j)),     # beta1   column tile
            pl.BlockSpec((tn, D), lambda j: (j, 0)),     # w2_t    row tile (K axis)
            pl.BlockSpec((1, D), lambda j: (0, 0)),      # gamma2  (resident)
            pl.BlockSpec((1, D), lambda j: (0, 0)),      # beta2   (resident)
        ],
        out_specs=pl.BlockSpec((B, D), lambda j: (0, 0)),   # resident; written at last j
        scratch_shapes=[pltpu.VMEM((B, D), jnp.float32)],   # fc2 accumulator
        compiler_params=pltpu.CompilerParams(
            # the single grid axis is the fc2 contraction axis -> accumulator pattern
            dimension_semantics=("arbitrary",),
            vmem_limit_bytes=vmem_limit,
        ),
    )(x, w1_t, g1, be1, w2_t, g2, be2)


def make_params(dim, key):
    k1, k2, k3, k4 = jax.random.split(key, 4)
    # kaiming_normal_ (fan_in, relu gain): std = sqrt(2 / fan_in)
    std = (2.0 / dim) ** 0.5
    w1 = std * jax.random.normal(k1, (dim, dim), jnp.float32)
    w2 = std * jax.random.normal(k2, (dim, dim), jnp.float32)
    # Linear bias default init: U(-1/sqrt(fan_in), 1/sqrt(fan_in)) (kept for the reference;
    # they are mathematically cancelled by the following BatchNorm).
    bound = 1.0 / (dim ** 0.5)
    b1 = jax.random.uniform(k3, (dim,), jnp.float32, -bound, bound)
    b2 = jax.random.uniform(k4, (dim,), jnp.float32, -bound, bound)
    return dict(
        w1=w1, b1=b1, w2=w2, b2=b2,
        g1=jnp.ones((dim,), jnp.float32), be1=jnp.zeros((dim,), jnp.float32),
        g2=jnp.ones((dim,), jnp.float32), be2=jnp.zeros((dim,), jnp.float32),
    )


def resblock_reference(x, p):
    """Pure-JAX f32 reference with exact PyTorch semantics (biases included)."""
    h1 = x @ p["w1"].T + p["b1"]
    m1 = h1.mean(0)
    v1 = ((h1 - m1) ** 2).mean(0)
    a1 = jnp.maximum(p["g1"] * (h1 - m1) / jnp.sqrt(v1 + EPS) + p["be1"], 0.0)
    h2 = a1 @ p["w2"].T + p["b2"]
    m2 = h2.mean(0)
    v2 = ((h2 - m2) ** 2).mean(0)
    bn2 = p["g2"] * (h2 - m2) / jnp.sqrt(v2 + EPS) + p["be2"]
    return jnp.maximum(bn2 + x, 0.0)


if __name__ == "__main__":
    B, D = 8, 512   # D multiple of 128 -> lane-dense tiles; grid of 2 feature tiles
    key = jax.random.PRNGKey(0)
    kx, kp = jax.random.split(key)
    x = jax.random.normal(kx, (B, D), jnp.float32)
    params = make_params(D, kp)

    out = jax.block_until_ready(resblock_forward(x, params))
    ref = resblock_reference(x, params)

    assert out.shape == (B, D)
    max_abs = float(jnp.max(jnp.abs(out - ref)))
    rel_l2 = float(jnp.linalg.norm(out - ref) / jnp.linalg.norm(ref))
    # Tolerances relaxed for bf16 matmul operands (f32 accumulation); a real bug would
    # produce O(1) errors, not O(1e-2).
    assert max_abs < 7.5e-2 and rel_l2 < 1e-2, (
        f"mismatch vs pure-JAX reference: max_abs={max_abs:.3e} rel_l2={rel_l2:.3e}")
    print("KERNEL_OK")
</pallas_src>

<mosaic_0001>
module attributes {stable_mosaic.version = 11 : i64} {
  func.func @_resblock_kernel(%arg0: i32, %arg1: memref<8x512xf32, #tpu.memory_space<vmem>>, %arg2: memref<512x256xbf16, #tpu.memory_space<vmem>>, %arg3: memref<1x256xf32, #tpu.memory_space<vmem>>, %arg4: memref<1x256xf32, #tpu.memory_space<vmem>>, %arg5: memref<256x512xbf16, #tpu.memory_space<vmem>>, %arg6: memref<1x512xf32, #tpu.memory_space<vmem>>, %arg7: memref<1x512xf32, #tpu.memory_space<vmem>>, %arg8: memref<8x512xf32, #tpu.memory_space<vmem>>, %arg9: memref<8x512xf32, #tpu.memory_space<vmem>>) attributes {dimension_semantics = [#tpu.dimension_semantics<arbitrary>], iteration_bounds = array<i64: 2>, scalar_prefetch = 0 : i64, scratch_operands = 1 : i64, tpu.core_type = #tpu.core_type<tc>, window_params = [{pipeline_mode = #tpu.pipeline_mode<synchronous>, transform_indices = @transform_0, window_bounds = array<i64: 8, 512>}, {transform_indices = @transform_1, window_bounds = array<i64: 512, 256>}, {transform_indices = @transform_2, window_bounds = array<i64: 1, 256>}, {transform_indices = @transform_3, window_bounds = array<i64: 1, 256>}, {transform_indices = @transform_4, window_bounds = array<i64: 256, 512>}, {pipeline_mode = #tpu.pipeline_mode<synchronous>, transform_indices = @transform_5, window_bounds = array<i64: 1, 512>}, {pipeline_mode = #tpu.pipeline_mode<synchronous>, transform_indices = @transform_6, window_bounds = array<i64: 1, 512>}, {pipeline_mode = #tpu.pipeline_mode<synchronous>, transform_indices = @transform_7, window_bounds = array<i64: 8, 512>}]} {
    %c0_i32 = arith.constant 0 : i32
    %0 = arith.cmpi eq, %arg0, %c0_i32 : i32
    %1 = arith.extui %0 : i1 to i32
    %c0_i32_0 = arith.constant 0 : i32
    %2 = arith.cmpi ne, %1, %c0_i32_0 : i32
    scf.if %2 {
      %cst_23 = arith.constant 0.000000e+00 : f32
      %43 = vector.broadcast %cst_23 : f32 to vector<8x512xf32>
      %c0_24 = arith.constant 0 : index
      %c0_25 = arith.constant 0 : index
      %44 = vector.load %arg9[%c0_24, %c0_25] : memref<8x512xf32, #tpu.memory_space<vmem>>, vector<8x512xf32>
      tpu.vector_store %arg9[%c0_24, %c0_25], %43 {strides = array<i32>} : memref<8x512xf32, #tpu.memory_space<vmem>>, vector<8x512xf32>,
    } else {
    }
    %c0 = arith.constant 0 : index
    %c0_1 = arith.constant 0 : index
    %3 = vector.load %arg1[%c0, %c0_1] : memref<8x512xf32, #tpu.memory_space<vmem>>, vector<8x512xf32>
    %4 = arith.truncf %3 : vector<8x512xf32> to vector<8x512xbf16>
    %c0_2 = arith.constant 0 : index
    %c0_3 = arith.constant 0 : index
    %5 = vector.load %arg2[%c0_2, %c0_3] : memref<512x256xbf16, #tpu.memory_space<vmem>>, vector<512x256xbf16>
    %cst = arith.constant dense<0.000000e+00> : vector<8x256xf32>
    %6 = tpu.matmul %4, %5, %cst {dimension_numbers = #tpu.dot_dimension_numbers<[1], [0], [0], [1], [0, 0, 1, 1], [], []>} : vector<8x512xbf16>, vector<512x256xbf16>, vector<8x256xf32> -> vector<8x256xf32>
    %cst_4 = arith.constant dense<0.000000e+00> : vector<256xf32>
    %7 = vector.multi_reduction <add>, %6, %cst_4 [0] : vector<8x256xf32> to vector<256xf32>
    %8 = vector.shape_cast %7 : vector<256xf32> to vector<1x256xf32>
    %cst_5 = arith.constant 1.250000e-01 : f32
    %9 = vector.broadcast %cst_5 : f32 to vector<1x256xf32>
    %10 = arith.mulf %8, %9 : vector<1x256xf32>
    %11 = arith.mulf %6, %6 : vector<8x256xf32>
    %cst_6 = arith.constant dense<0.000000e+00> : vector<256xf32>
    %12 = vector.multi_reduction <add>, %11, %cst_6 [0] : vector<8x256xf32> to vector<256xf32>
    %13 = vector.shape_cast %12 : vector<256xf32> to vector<1x256xf32>
    %cst_7 = arith.constant 1.250000e-01 : f32
    %14 = vector.broadcast %cst_7 : f32 to vector<1x256xf32>
    %15 = arith.mulf %13, %14 : vector<1x256xf32>
    %16 = arith.mulf %10, %10 : vector<1x256xf32>
    %17 = arith.subf %15, %16 : vector<1x256xf32>
    %cst_8 = arith.constant 0.000000e+00 : f32
    %18 = vector.broadcast %cst_8 : f32 to vector<1x256xf32>
    %19 = arith.maximumf %17, %18 : vector<1x256xf32>
    %c0_9 = arith.constant 0 : index
    %c0_10 = arith.constant 0 : index
    %20 = vector.load %arg3[%c0_9, %c0_10] : memref<1x256xf32, #tpu.memory_space<vmem>>, vector<1x256xf32>
    %cst_11 = arith.constant 9.99999974E-6 : f32
    %21 = vector.broadcast %cst_11 : f32 to vector<1x256xf32>
    %22 = arith.addf %19, %21 : vector<1x256xf32>
    %23 = math.rsqrt %22 : vector<1x256xf32>
    %24 = arith.mulf %20, %23 : vector<1x256xf32>
    %c0_12 = arith.constant 0 : index
    %c0_13 = arith.constant 0 : index
    %25 = vector.load %arg4[%c0_12, %c0_13] : memref<1x256xf32, #tpu.memory_space<vmem>>, vector<1x256xf32>
    %26 = arith.mulf %10, %24 : vector<1x256xf32>
    %27 = arith.subf %25, %26 : vector<1x256xf32>
    %28 = vector.broadcast %24 : vector<1x256xf32> to vector<8x256xf32>
    %29 = arith.mulf %6, %28 : vector<8x256xf32>
    %30 = vector.broadcast %27 : vector<1x256xf32> to vector<8x256xf32>
    %31 = arith.addf %29, %30 : vector<8x256xf32>
    %cst_14 = arith.constant 0.000000e+00 : f32
    %32 = vector.broadcast %cst_14 : f32 to vector<8x256xf32>
    %33 = arith.maximumf %31, %32 : vector<8x256xf32>
    %c0_15 = arith.constant 0 : index
    %c0_16 = arith.constant 0 : index
    %34 = vector.load %arg9[%c0_15, %c0_16] : memref<8x512xf32, #tpu.memory_space<vmem>>, vector<8x512xf32>
    %35 = arith.truncf %33 : vector<8x256xf32> to vector<8x256xbf16>
    %c0_17 = arith.constant 0 : index
    %c0_18 = arith.constant 0 : index
    %36 = vector.load %arg5[%c0_17, %c0_18] : memref<256x512xbf16, #tpu.memory_space<vmem>>, vector<256x512xbf16>
    %cst_19 = arith.constant dense<0.000000e+00> : vector<8x512xf32>
    %37 = tpu.matmul %35, %36, %cst_19 {dimension_numbers = #tpu.dot_dimension_numbers<[1], [0], [0], [1], [0, 0, 1, 1], [], []>} : vector<8x256xbf16>, vector<256x512xbf16>, vector<8x512xf32> -> vector<8x512xf32>
    %38 = arith.addf %34, %37 : vector<8x512xf32>
    %c0_20 = arith.constant 0 : index
    %c0_21 = arith.constant 0 : index
    %39 = vector.load %arg9[%c0_20, %c0_21] : memref<8x512xf32, #tpu.memory_space<vmem>>, vector<8x512xf32>
    tpu.vector_store %arg9[%c0_20, %c0_21], %38 {strides = array<i32>} : memref<8x512xf32, #tpu.memory_space<vmem>>, vector<8x512xf32>,
    %c1_i32 = arith.constant 1 : i32
    %40 = arith.cmpi eq, %arg0, %c1_i32 : i32
    %41 = arith.extui %40 : i1 to i32
    %c0_i32_22 = arith.constant 0 : i32
    %42 = arith.cmpi ne, %41, %c0_i32_22 : i32
    scf.if %42 {
      %c0_23 = arith.constant 0 : index
      %c0_24 = arith.constant 0 : index
      %43 = vector.load %arg9[%c0_23, %c0_24] : memref<8x512xf32, #tpu.memory_space<vmem>>, vector<8x512xf32>
      %cst_25 = arith.constant dense<0.000000e+00> : vector<512xf32>
      %44 = vector.multi_reduction <add>, %43, %cst_25 [0] : vector<8x512xf32> to vector<512xf32>
      %45 = vector.shape_cast %44 : vector<512xf32> to vector<1x512xf32>
      %cst_26 = arith.constant 1.250000e-01 : f32
      %46 = vector.broadcast %cst_26 : f32 to vector<1x512xf32>
      %47 = arith.mulf %45, %46 : vector<1x512xf32>
      %48 = arith.mulf %43, %43 : vector<8x512xf32>
      %cst_27 = arith.constant dense<0.000000e+00> : vector<512xf32>
      %49 = vector.multi_reduction <add>, %48, %cst_27 [0] : vector<8x512xf32> to vector<512xf32>
      %50 = vector.shape_cast %49 : vector<512xf32> to vector<1x512xf32>
      %cst_28 = arith.constant 1.250000e-01 : f32
      %51 = vector.broadcast %cst_28 : f32 to vector<1x512xf32>
      %52 = arith.mulf %50, %51 : vector<1x512xf32>
      %53 = arith.mulf %47, %47 : vector<1x512xf32>
      %54 = arith.subf %52, %53 : vector<1x512xf32>
      %cst_29 = arith.constant 0.000000e+00 : f32
      %55 = vector.broadcast %cst_29 : f32 to vector<1x512xf32>
      %56 = arith.maximumf %54, %55 : vector<1x512xf32>
      %c0_30 = arith.constant 0 : index
      %c0_31 = arith.constant 0 : index
      %57 = vector.load %arg6[%c0_30, %c0_31] : memref<1x512xf32, #tpu.memory_space<vmem>>, vector<1x512xf32>
      %cst_32 = arith.constant 9.99999974E-6 : f32
      %58 = vector.broadcast %cst_32 : f32 to vector<1x512xf32>
      %59 = arith.addf %56, %58 : vector<1x512xf32>
      %60 = math.rsqrt %59 : vector<1x512xf32>
      %61 = arith.mulf %57, %60 : vector<1x512xf32>
      %c0_33 = arith.constant 0 : index
      %c0_34 = arith.constant 0 : index
      %62 = vector.load %arg7[%c0_33, %c0_34] : memref<1x512xf32, #tpu.memory_space<vmem>>, vector<1x512xf32>
      %63 = arith.mulf %47, %61 : vector<1x512xf32>
      %64 = arith.subf %62, %63 : vector<1x512xf32>
      %65 = vector.broadcast %61 : vector<1x512xf32> to vector<8x512xf32>
      %66 = arith.mulf %43, %65 : vector<8x512xf32>
      %67 = vector.broadcast %64 : vector<1x512xf32> to vector<8x512xf32>
      %68 = arith.addf %66, %67 : vector<8x512xf32>
      %69 = arith.addf %68, %3 : vector<8x512xf32>
      %cst_35 = arith.constant 0.000000e+00 : f32
      %70 = vector.broadcast %cst_35 : f32 to vector<8x512xf32>
      %71 = arith.maximumf %69, %70 : vector<8x512xf32>
      %c0_36 = arith.constant 0 : index
      %c0_37 = arith.constant 0 : index
      %72 = vector.load %arg8[%c0_36, %c0_37] : memref<8x512xf32, #tpu.memory_space<vmem>>, vector<8x512xf32>
      tpu.vector_store %arg8[%c0_36, %c0_37], %71 {strides = array<i32>} : memref<8x512xf32, #tpu.memory_space<vmem>>, vector<8x512xf32>,
    } else {
    }
    return
  }
  func.func @transform_0(%arg0: i32) -> (i32, i32) {
    %c0_i32 = arith.constant 0 : i32
    %c0_i32_0 = arith.constant 0 : i32
    %c0_i32_1 = arith.constant 0 : i32
    return %c0_i32, %c0_i32_0 : i32, i32
  }
  func.func @transform_1(%arg0: i32) -> (i32, i32) {
    %c0_i32 = arith.constant 0 : i32
    %c0_i32_0 = arith.constant 0 : i32
    return %c0_i32, %arg0 : i32, i32
  }
  func.func @transform_2(%arg0: i32) -> (i32, i32) {
    %c0_i32 = arith.constant 0 : i32
    %c0_i32_0 = arith.constant 0 : i32
    return %c0_i32, %arg0 : i32, i32
  }
  func.func @transform_3(%arg0: i32) -> (i32, i32) {
    %c0_i32 = arith.constant 0 : i32
    %c0_i32_0 = arith.constant 0 : i32
    return %c0_i32, %arg0 : i32, i32
  }
  func.func @transform_4(%arg0: i32) -> (i32, i32) {
    %c0_i32 = arith.constant 0 : i32
    %c0_i32_0 = arith.constant 0 : i32
    return %arg0, %c0_i32 : i32, i32
  }
  func.func @transform_5(%arg0: i32) -> (i32, i32) {
    %c0_i32 = arith.constant 0 : i32
    %c0_i32_0 = arith.constant 0 : i32
    %c0_i32_1 = arith.constant 0 : i32
    return %c0_i32, %c0_i32_0 : i32, i32
  }
  func.func @transform_6(%arg0: i32) -> (i32, i32) {
    %c0_i32 = arith.constant 0 : i32
    %c0_i32_0 = arith.constant 0 : i32
    %c0_i32_1 = arith.constant 0 : i32
    return %c0_i32, %c0_i32_0 : i32, i32
  }
  func.func @transform_7(%arg0: i32) -> (i32, i32) {
    %c0_i32 = arith.constant 0 : i32
    %c0_i32_0 = arith.constant 0 : i32
    %c0_i32_1 = arith.constant 0 : i32
    return %c0_i32, %c0_i32_0 : i32, i32
  }
}

</mosaic_0001>

<llo_original>
// kernel: resblock_forward.1
$region0: #{resblock_forward.1}
  #allocation0 [shape = 'u32[]', space=smem, size = 0x4, offset = 0x4, fixed_abs, tag = 'smem constant byte address 0x4 - core index']
  #allocation1 [shape = 'u32[144,128]{1,0:T(1,128)}', space=vmem, size = 0x12000, scoped, tag = 'internal scratch']
  #allocation2 [shape = 'f32[8,512]{1,0:T(8,128)}', space=vmem, size = 0x4000, scoped, tag = 'scratch operand']
  %s0 = inlined_call_operand.vmem [shape: f32[8,512], index: 0, kind: input, shape index: {}]
  %s1 = inlined_call_operand.vmem [shape: bf16[512,512], index: 1, kind: input, shape index: {}]
  %s2 = inlined_call_operand.vmem [shape: f32[1,512], index: 2, kind: input, shape index: {}]
  %s3 = inlined_call_operand.vmem [shape: f32[1,512], index: 3, kind: input, shape index: {}]
  %s4 = inlined_call_operand.vmem [shape: bf16[512,512], index: 4, kind: input, shape index: {}]
  %s5 = inlined_call_operand.vmem [shape: f32[1,512], index: 5, kind: input, shape index: {}]
  %s6 = inlined_call_operand.vmem [shape: f32[1,512], index: 6, kind: input, shape index: {}]
  %s7 = inlined_call_operand.hbm [shape: f32[8,512], index: 7, kind: output, shape index: {}]
  %s8 = sld [smem:[#allocation0]]
  $region107: #{resblock_forward.1} parent=0
    _
  %s10 = ssub.s32 1, %s8
  %s11 = scalar_select 0, %s10, %s8
  $region1: #{resblock_forward.1} parent=0
    #allocation3 [shape = 'u8[524288]{0}', space=vmem, size = 0x80000, scoped, tag = 'input window, operand 1']
    #allocation4 [shape = 'u8[16384]{0}', space=vmem, size = 0x4000, scoped, tag = 'output window, operand 0, single buffered']
    #allocation5 [shape = 's32[2]{0}', space=sflag, size = 0x8, scoped, tag = 'scoped memory for resblock_forward.1']
    %12 = vsyncpa [#allocation5], 0
    loop: start=0, step=1, limit=4
    $region2: #{resblock_forward.1} parent=1 // loop_pre_header
      _
    $region3: #{resblock_forward.1} parent=1 // loop_header
      %s14 = sphi 0, %s18
      %p15 = scmp.ge.s32.totalorder %s14, 4
      %s22 = sphi 0, %s22
      %s24 = sphi 0, %s22
      %s25 = sphi 0, %s24
      %s39 = sphi 0, %s25
      %s45 = sphi 0, %s47
      %s48 = sphi 0, %s45
      %s49 = sphi 0, %s48
      %s65 = sphi 0, %s49
      %s71 = sphi 0, %s73
      %s74 = sphi 0, %s71
      %s75 = sphi 0, %s74
      %s91 = sphi 0, %s75
      %s97 = sphi 0, %s99
      %s100 = sphi 0, %s97
      %s101 = sphi 0, %s100
      %s117 = sphi 0, %s101
      %s123 = sphi 0, %s125
      %s126 = sphi 0, %s123
      %s127 = sphi 0, %s126
      %s143 = sphi 0, %s127
      %s147 = sphi 0, %s147
      %s149 = sphi 0, %s147
      %s150 = sphi 0, %s149
      %s164 = sphi 0, %s150
      %s168 = sphi 0, %s168
      %s170 = sphi 0, %s168
      %s171 = sphi 0, %s170
      %s185 = sphi 0, %s171
      %s189 = sphi 0, %s189
      %s191 = sphi 0, %s189
      %s192 = sphi 0, %s191
      %s206 = sphi 0, %s192
    $region4: #{resblock_forward.1} parent=1 // loop_header_branch
      %17 = sbr.rel (%p15) target = $region8
    $region5: #{resblock_forward.1} parent=1 // loop_body
      %s19 = ssub.s32 %s14, 1
      %s20 = ssub.s32 %s14, 2
      %s21 = sadd.s32 %s14, 1
      %s23 = sadd.s32 %s22, 1
      %p26 = scmp.eq.s32.totalorder %s14, 1
      %p27 = scmp.ne.s32.totalorder %s22, %s24
      %p28 = scmp.eq.s32.totalorder %s14, 0
      %p29 = por %p27, %p28
      %p30 = scmp.ne.s32.totalorder %s22, %s24
      %p31 = scmp.eq.s32.totalorder %s19, 1
      %p32 = por %p30, %p31
      %p33 = scmp.ne.s32.totalorder %s24, %s25
      %p34 = scmp.eq.s32.totalorder %s19, 0
      %p35 = por %p33, %p34
      %p36 = scmp.ne.s32.totalorder %s24, %s25
      %p37 = scmp.eq.s32.totalorder %s20, 1
      %p38 = por %p36, %p37
      %p40 = scmp.ne.s32.totalorder %s25, %s39
      %p41 = scmp.eq.s32.totalorder %s20, 0
      %p42 = por %p40, %p41
      %s43 = ssub.s32 %s14, %s21
      %p44 = scmp.eq.s32.totalorder %s43, 0
      %s46 = sadd.s32 %s45, 1
      %s47 = scalar_select %p44, %s45, %s46
      %p50 = pneg %p44
      %p51 = scmp.eq.s32.totalorder %s14, 1
      %p52 = por %p50, %p51
      %p53 = scmp.ne.s32.totalorder %s45, %s48
      %p54 = scmp.eq.s32.totalorder %s14, 0
      %p55 = por %p53, %p54
      %p56 = scmp.ne.s32.totalorder %s45, %s48
      %p57 = scmp.eq.s32.totalorder %s19, 1
      %p58 = por %p56, %p57
      %p59 = scmp.ne.s32.totalorder %s48, %s49
      %p60 = scmp.eq.s32.totalorder %s19, 0
      %p61 = por %p59, %p60
      %p62 = scmp.ne.s32.totalorder %s48, %s49
      %p63 = scmp.eq.s32.totalorder %s20, 1
      %p64 = por %p62, %p63
      %p66 = scmp.ne.s32.totalorder %s49, %s65
      %p67 = scmp.eq.s32.totalorder %s20, 0
      %p68 = por %p66, %p67
      %s69 = ssub.s32 %s14, %s21
      %p70 = scmp.eq.s32.totalorder %s69, 0
      %s72 = sadd.s32 %s71, 1
      %s73 = scalar_select %p70, %s71, %s72
      %p76 = pneg %p70
      %p77 = scmp.eq.s32.totalorder %s14, 1
      %p78 = por %p76, %p77
      %p79 = scmp.ne.s32.totalorder %s71, %s74
      %p80 = scmp.eq.s32.totalorder %s14, 0
      %p81 = por %p79, %p80
      %p82 = scmp.ne.s32.totalorder %s71, %s74
      %p83 = scmp.eq.s32.totalorder %s19, 1
      %p84 = por %p82, %p83
      %p85 = scmp.ne.s32.totalorder %s74, %s75
      %p86 = scmp.eq.s32.totalorder %s19, 0
      %p87 = por %p85, %p86
      %p88 = scmp.ne.s32.totalorder %s74, %s75
      %p89 = scmp.eq.s32.totalorder %s20, 1
      %p90 = por %p88, %p89
      %p92 = scmp.ne.s32.totalorder %s75, %s91
      %p93 = scmp.eq.s32.totalorder %s20, 0
      %p94 = por %p92, %p93
      %s95 = ssub.s32 %s14, %s21
      %p96 = scmp.eq.s32.totalorder %s95, 0
      %s98 = sadd.s32 %s97, 1
      %s99 = scalar_select %p96, %s97, %s98
      %p102 = pneg %p96
      %p103 = scmp.eq.s32.totalorder %s14, 1
      %p104 = por %p102, %p103
      %p105 = scmp.ne.s32.totalorder %s97, %s100
      %p106 = scmp.eq.s32.totalorder %s14, 0
      %p107 = por %p105, %p106
      %p108 = scmp.ne.s32.totalorder %s97, %s100
      %p109 = scmp.eq.s32.totalorder %s19, 1
      %p110 = por %p108, %p109
      %p111 = scmp.ne.s32.totalorder %s100, %s101
      %p112 = scmp.eq.s32.totalorder %s19, 0
      %p113 = por %p111, %p112
      %p114 = scmp.ne.s32.totalorder %s100, %s101
      %p115 = scmp.eq.s32.totalorder %s20, 1
      %p116 = por %p114, %p115
      %p118 = scmp.ne.s32.totalorder %s101, %s117
      %p119 = scmp.eq.s32.totalorder %s20, 0
      %p120 = por %p118, %p119
      %s121 = ssub.s32 %s14, %s21
      %p122 = scmp.eq.s32.totalorder %s121, 0
      %s124 = sadd.s32 %s123, 1
      %s125 = scalar_select %p122, %s123, %s124
      %p128 = pneg %p122
      %p129 = scmp.eq.s32.totalorder %s14, 1
      %p130 = por %p128, %p129
      %p131 = scmp.ne.s32.totalorder %s123, %s126
      %p132 = scmp.eq.s32.totalorder %s14, 0
      %p133 = por %p131, %p132
      %p134 = scmp.ne.s32.totalorder %s123, %s126
      %p135 = scmp.eq.s32.totalorder %s19, 1
      %p136 = por %p134, %p135
      %p137 = scmp.ne.s32.totalorder %s126, %s127
      %p138 = scmp.eq.s32.totalorder %s19, 0
      %p139 = por %p137, %p138
      %p140 = scmp.ne.s32.totalorder %s126, %s127
      %p141 = scmp.eq.s32.totalorder %s20, 1
      %p142 = por %p140, %p141
      %p144 = scmp.ne.s32.totalorder %s127, %s143
      %p145 = scmp.eq.s32.totalorder %s20, 0
      %p146 = por %p144, %p145
      %s148 = sadd.s32 %s147, 1
      %p151 = scmp.eq.s32.totalorder %s14, 1
      %p152 = scmp.ne.s32.totalorder %s147, %s149
      %p153 = scmp.eq.s32.totalorder %s14, 0
      %p154 = por %p152, %p153
      %p155 = scmp.ne.s32.totalorder %s147, %s149
      %p156 = scmp.eq.s32.totalorder %s19, 1
      %p157 = por %p155, %p156
      %p158 = scmp.ne.s32.totalorder %s149, %s150
      %p159 = scmp.eq.s32.totalorder %s19, 0
      %p160 = por %p158, %p159
      %p161 = scmp.ne.s32.totalorder %s149, %s150
      %p162 = scmp.eq.s32.totalorder %s20, 1
      %p163 = por %p161, %p162
      %p165 = scmp.ne.s32.totalorder %s150, %s164
      %p166 = scmp.eq.s32.totalorder %s20, 0
      %p167 = por %p165, %p166
      %s169 = sadd.s32 %s168, 1
      %p172 = scmp.eq.s32.totalorder %s14, 1
      %p173 = scmp.ne.s32.totalorder %s168, %s170
      %p174 = scmp.eq.s32.totalorder %s14, 0
      %p175 = por %p173, %p174
      %p176 = scmp.ne.s32.totalorder %s168, %s170
      %p177 = scmp.eq.s32.totalorder %s19, 1
      %p178 = por %p176, %p177
      %p179 = scmp.ne.s32.totalorder %s170, %s171
      %p180 = scmp.eq.s32.totalorder %s19, 0
      %p181 = por %p179, %p180
      %p182 = scmp.ne.s32.totalorder %s170, %s171
      %p183 = scmp.eq.s32.totalorder %s20, 1
      %p184 = por %p182, %p183
      %p186 = scmp.ne.s32.totalorder %s171, %s185
      %p187 = scmp.eq.s32.totalorder %s20, 0
      %p188 = por %p186, %p187
      %s190 = sadd.s32 %s189, 1
      %p193 = scmp.eq.s32.totalorder %s14, 1
      %p194 = scmp.ne.s32.totalorder %s189, %s191
      %p195 = scmp.eq.s32.totalorder %s14, 0
      %p196 = por %p194, %p195
      %p197 = scmp.ne.s32.totalorder %s189, %s191
      %p198 = scmp.eq.s32.totalorder %s19, 1
      %p199 = por %p197, %p198
      %p200 = scmp.ne.s32.totalorder %s191, %s192
      %p201 = scmp.eq.s32.totalorder %s19, 0
      %p202 = por %p200, %p201
      %p203 = scmp.ne.s32.totalorder %s191, %s192
      %p204 = scmp.eq.s32.totalorder %s20, 1
      %p205 = por %p203, %p204
      %p207 = scmp.ne.s32.totalorder %s192, %s206
      %p208 = scmp.eq.s32.totalorder %s20, 0
      %p209 = por %p207, %p208
      %p210 = scmp.le.s32.totalorder 1, %s14
      %p211 = scmp.lt.s32.totalorder %s14, 3
      %p212 = pnand %p210, %p211
      %p213 = pneg %p212
      // Predicated region
      $region9: #{resblock_forward.1} parent=5 // pred_check
        _
      $region10: #{resblock_forward.1} parent=5 // pred_check_branch
        %215 = sbr.rel (%p212) target = $region12
      $region11: #{resblock_forward.1} parent=5 // pred_region
        %s216 = ssub.s32 %s14, 1
        // Predicated region
        $region13: #{resblock_forward.1} parent=11 // pred_check
          %p217 = pneg %p35
        $region14: #{resblock_forward.1} parent=11 // pred_check_branch
          %219 = sbr.rel (%p217) target = $region16
        $region15: #{resblock_forward.1} parent=11 // pred_region
          _
        $region16: #{resblock_forward.1} parent=11 // pred_fallthru
          _
        // Predicated region
        $region17: #{resblock_forward.1} parent=11 // pred_check
          %p220 = pneg %p160
        $region18: #{resblock_forward.1} parent=11 // pred_check_branch
          %222 = sbr.rel (%p220) target = $region20
        $region19: #{resblock_forward.1} parent=11 // pred_region
          _
        $region20: #{resblock_forward.1} parent=11 // pred_fallthru
          _
        // Predicated region
        $region21: #{resblock_forward.1} parent=11 // pred_check
          %p223 = pneg %p181
        $region22: #{resblock_forward.1} parent=11 // pred_check_branch
          %225 = sbr.rel (%p223) target = $region24
        $region23: #{resblock_forward.1} parent=11 // pred_region
          _
        $region24: #{resblock_forward.1} parent=11 // pred_fallthru
          _
      $region12: #{resblock_forward.1} parent=5 // pred_fallthru
        _
      %p226 = scmp.lt.s32.totalorder %s14, 2
      // Predicated region
      $region25: #{resblock_forward.1} parent=5 // pred_check
        %p227 = pneg %p226
      $region26: #{resblock_forward.1} parent=5 // pred_check_branch
        %229 = sbr.rel (%p227) target = $region28
      $region27: #{resblock_forward.1} parent=5 // pred_region
        // Predicated region
        $region29: #{resblock_forward.1} parent=27 // pred_check
          %p230 = pneg %p55
        $region30: #{resblock_forward.1} parent=27 // pred_check_branch
          %232 = sbr.rel (%p230) target = $region32
        $region31: #{resblock_forward.1} parent=27 // pred_region
          %s233 = sand.u32 %s45, 1
          %s234 = sand.u32 %s45, 1
          %s235 = smul.addr %s234, 512
          %s236 = scalar_lea.vmem [#allocation3], %s235
          %s237 = smul.u32 2, %s14
          %s238 = smul.addr %s237, 4
          %s239 = scalar_lea.vmem %s1, %s238
          // Predicated region
          $region33: #{resblock_forward.1} parent=31 // pred_check
            _
          $region34: #{resblock_forward.1} parent=31 // pred_check_branch
            %241 = sbr.rel (0) target = $region36
          $region35: #{resblock_forward.1} parent=31 // pred_region
            // Predicated region
            $region37: #{resblock_forward.1} parent=35 // pred_check
              _
            $region38: #{resblock_forward.1} parent=35 // pred_check_branch
              %243 = sbr.rel (0) target = $region40
            $region39: #{resblock_forward.1} parent=35 // pred_region
              // Predicated region
              $region52: #{resblock_forward.1} parent=39 // pred_check
                _
              $region53: #{resblock_forward.1} parent=39 // pred_check_branch
                %384 = sbr.rel (0) target = $region55
              $region54: #{resblock_forward.1} parent=39 // pred_region
                loop: start=0, step=1, limit=1
                $region56: #{resblock_forward.1} parent=54 // loop_pre_header
                  _
                $region57: #{resblock_forward.1} parent=54 // loop_header
                  %s386 = sphi 0, %s390
                  %p387 = scmp.ge.s32.totalorder %s386, 1
                  %s391 = sphi %s239, %s239
                  %s392 = sphi %s236, %s236
                $region58: #{resblock_forward.1} parent=54 // loop_header_branch
                  %389 = sbr.rel (%p387) target = $region62
                $region59: #{resblock_forward.1} parent=54 // loop_body
                  %v393 = vld [vmem:[%s391] sm:$0xff]
                  %394 = vst [vmem:[%s392] sm:$0xff] %v393
                  %v395 = vld [vmem:[%s391 + $0x10] sm:$0xff]
                  %396 = vst [vmem:[%s392 + $0x8] sm:$0xff] %v395
                  %v397 = vld [vmem:[%s391 + $0x20] sm:$0xff]
                  %398 = vst [vmem:[%s392 + $0x10] sm:$0xff] %v397
                  %v399 = vld [vmem:[%s391 + $0x30] sm:$0xff]
                  %400 = vst [vmem:[%s392 + $0x18] sm:$0xff] %v399
                  %v401 = vld [vmem:[%s391 + $0x40] sm:$0xff]
                  %402 = vst [vmem:[%s392 + $0x20] sm:$0xff] %v401
                  %v403 = vld [vmem:[%s391 + $0x50] sm:$0xff]
                  %404 = vst [vmem:[%s392 + $0x28] sm:$0xff] %v403
                  %v405 = vld [vmem:[%s391 + $0x60] sm:$0xff]
                  %406 = vst [vmem:[%s392 + $0x30] sm:$0xff] %v405
                  %v407 = vld [vmem:[%s391 + $0x70] sm:$0xff]
                  %408 = vst [vmem:[%s392 + $0x38] sm:$0xff] %v407
                  %v409 = vld [vmem:[%s391 + $0x80] sm:$0xff]
                  %410 = vst [vmem:[%s392 + $0x40] sm:$0xff] %v409
                  %v411 = vld [vmem:[%s391 + $0x90] sm:$0xff]
                  %412 = vst [vmem:[%s392 + $0x48] sm:$0xff] %v411
                  %v413 = vld [vmem:[%s391 + $0xa0] sm:$0xff]
                  %414 = vst [vmem:[%s392 + $0x50] sm:$0xff] %v413
                  %v415 = vld [vmem:[%s391 + $0xb0] sm:$0xff]
                  %416 = vst [vmem:[%s392 + $0x58] sm:$0xff] %v415
                  %v417 = vld [vmem:[%s391 + $0xc0] sm:$0xff]
                  %418 = vst [vmem:[%s392 + $0x60] sm:$0xff] %v417
                  %v419 = vld [vmem:[%s391 + $0xd0] sm:$0xff]
                  %420 = vst [vmem:[%s392 + $0x68] sm:$0xff] %v419
                  %v421 = vld [vmem:[%s391 + $0xe0] sm:$0xff]
                  %422 = vst [vmem:[%s392 + $0x70] sm:$0xff] %v421
                  %v423 = vld [vmem:[%s391 + $0xf0] sm:$0xff]
                  %424 = vst [vmem:[%s392 + $0x78] sm:$0xff] %v423
                  %v425 = vld [vmem:[%s391 + $0x100] sm:$0xff]
                  %426 = vst [vmem:[%s392 + $0x80] sm:$0xff] %v425
                  %v427 = vld [vmem:[%s391 + $0x110] sm:$0xff]
                  %428 = vst [vmem:[%s392 + $0x88] sm:$0xff] %v427
                  %v429 = vld [vmem:[%s391 + $0x120] sm:$0xff]
                  %430 = vst [vmem:[%s392 + $0x90] sm:$0xff] %v429
                  %v431 = vld [vmem:[%s391 + $0x130] sm:$0xff]
                  %432 = vst [vmem:[%s392 + $0x98] sm:$0xff] %v431
                  %v433 = vld [vmem:[%s391 + $0x140] sm:$0xff]
                  %434 = vst [vmem:[%s392 + $0xa0] sm:$0xff] %v433
                  %v435 = vld [vmem:[%s391 + $0x150] sm:$0xff]
                  %436 = vst [vmem:[%s392 + $0xa8] sm:$0xff] %v435
                  %v437 = vld [vmem:[%s391 + $0x160] sm:$0xff]
                  %438 = vst [vmem:[%s392 + $0xb0] sm:$0xff] %v437
                  %v439 = vld [vmem:[%s391 + $0x170] sm:$0xff]
                  %440 = vst [vmem:[%s392 + $0xb8] sm:$0xff] %v439
                  %v441 = vld [vmem:[%s391 + $0x180] sm:$0xff]
                  %442 = vst [vmem:[%s392 + $0xc0] sm:$0xff] %v441
                  %v443 = vld [vmem:[%s391 + $0x190] sm:$0xff]
                  %444 = vst [vmem:[%s392 + $0xc8] sm:$0xff] %v443
                  %v445 = vld [vmem:[%s391 + $0x1a0] sm:$0xff]
                  %446 = vst [vmem:[%s392 + $0xd0] sm:$0xff] %v445
                  %v447 = vld [vmem:[%s391 + $0x1b0] sm:$0xff]
                  %448 = vst [vmem:[%s392 + $0xd8] sm:$0xff] %v447
                  %v449 = vld [vmem:[%s391 + $0x1c0] sm:$0xff]
                  %450 = vst [vmem:[%s392 + $0xe0] sm:$0xff] %v449
                  %v451 = vld [vmem:[%s391 + $0x1d0] sm:$0xff]
                  %452 = vst [vmem:[%s392 + $0xe8] sm:$0xff] %v451
                  %v453 = vld [vmem:[%s391 + $0x1e0] sm:$0xff]
                  %454 = vst [vmem:[%s392 + $0xf0] sm:$0xff] %v453
                  %v455 = vld [vmem:[%s391 + $0x1f0] sm:$0xff]
                  %456 = vst [vmem:[%s392 + $0xf8] sm:$0xff] %v455
                  %v457 = vld [vmem:[%s391 + $0x200] sm:$0xff]
                  %458 = vst [vmem:[%s392 + $0x100] sm:$0xff] %v457
                  %v459 = vld [vmem:[%s391 + $0x210] sm:$0xff]
                  %460 = vst [vmem:[%s392 + $0x108] sm:$0xff] %v459
                  %v461 = vld [vmem:[%s391 + $0x220] sm:$0xff]
                  %462 = vst [vmem:[%s392 + $0x110] sm:$0xff] %v461
                  %v463 = vld [vmem:[%s391 + $0x230] sm:$0xff]
                  %464 = vst [vmem:[%s392 + $0x118] sm:$0xff] %v463
                  %v465 = vld [vmem:[%s391 + $0x240] sm:$0xff]
                  %466 = vst [vmem:[%s392 + $0x120] sm:$0xff] %v465
                  %v467 = vld [vmem:[%s391 + $0x250] sm:$0xff]
                  %468 = vst [vmem:[%s392 + $0x128] sm:$0xff] %v467
                  %v469 = vld [vmem:[%s391 + $0x260] sm:$0xff]
                  %470 = vst [vmem:[%s392 + $0x130] sm:$0xff] %v469
                  %v471 = vld [vmem:[%s391 + $0x270] sm:$0xff]
                  %472 = vst [vmem:[%s392 + $0x138] sm:$0xff] %v471
                  %v473 = vld [vmem:[%s391 + $0x280] sm:$0xff]
                  %474 = vst [vmem:[%s392 + $0x140] sm:$0xff] %v473
                  %v475 = vld [vmem:[%s391 + $0x290] sm:$0xff]
                  %476 = vst [vmem:[%s392 + $0x148] sm:$0xff] %v475
                  %v477 = vld [vmem:[%s391 + $0x2a0] sm:$0xff]
                  %478 = vst [vmem:[%s392 + $0x150] sm:$0xff] %v477
                  %v479 = vld [vmem:[%s391 + $0x2b0] sm:$0xff]
                  %480 = vst [vmem:[%s392 + $0x158] sm:$0xff] %v479
                  %v481 = vld [vmem:[%s391 + $0x2c0] sm:$0xff]
                  %482 = vst [vmem:[%s392 + $0x160] sm:$0xff] %v481
                  %v483 = vld [vmem:[%s391 + $0x2d0] sm:$0xff]
                  %484 = vst [vmem:[%s392 + $0x168] sm:$0xff] %v483
                  %v485 = vld [vmem:[%s391 + $0x2e0] sm:$0xff]
                  %486 = vst [vmem:[%s392 + $0x170] sm:$0xff] %v485
                  %v487 = vld [vmem:[%s391 + $0x2f0] sm:$0xff]
                  %488 = vst [vmem:[%s392 + $0x178] sm:$0xff] %v487
                  %v489 = vld [vmem:[%s391 + $0x300] sm:$0xff]
                  %490 = vst [vmem:[%s392 + $0x180] sm:$0xff] %v489
                  %v491 = vld [vmem:[%s391 + $0x310] sm:$0xff]
                  %492 = vst [vmem:[%s392 + $0x188] sm:$0xff] %v491
                  %v493 = vld [vmem:[%s391 + $0x320] sm:$0xff]
                  %494 = vst [vmem:[%s392 + $0x190] sm:$0xff] %v493
                  %v495 = vld [vmem:[%s391 + $0x330] sm:$0xff]
                  %496 = vst [vmem:[%s392 + $0x198] sm:$0xff] %v495
                  %v497 = vld [vmem:[%s391 + $0x340] sm:$0xff]
                  %498 = vst [vmem:[%s392 + $0x1a0] sm:$0xff] %v497
                  %v499 = vld [vmem:[%s391 + $0x350] sm:$0xff]
                  %500 = vst [vmem:[%s392 + $0x1a8] sm:$0xff] %v499
                  %v501 = vld [vmem:[%s391 + $0x360] sm:$0xff]
                  %502 = vst [vmem:[%s392 + $0x1b0] sm:$0xff] %v501
                  %v503 = vld [vmem:[%s391 + $0x370] sm:$0xff]
                  %504 = vst [vmem:[%s392 + $0x1b8] sm:$0xff] %v503
                  %v505 = vld [vmem:[%s391 + $0x380] sm:$0xff]
                  %506 = vst [vmem:[%s392 + $0x1c0] sm:$0xff] %v505
                  %v507 = vld [vmem:[%s391 + $0x390] sm:$0xff]
                  %508 = vst [vmem:[%s392 + $0x1c8] sm:$0xff] %v507
                  %v509 = vld [vmem:[%s391 + $0x3a0] sm:$0xff]
                  %510 = vst [vmem:[%s392 + $0x1d0] sm:$0xff] %v509
                  %v511 = vld [vmem:[%s391 + $0x3b0] sm:$0xff]
                  %512 = vst [vmem:[%s392 + $0x1d8] sm:$0xff] %v511
                  %v513 = vld [vmem:[%s391 + $0x3c0] sm:$0xff]
                  %514 = vst [vmem:[%s392 + $0x1e0] sm:$0xff] %v513
                  %v515 = vld [vmem:[%s391 + $0x3d0] sm:$0xff]
                  %516 = vst [vmem:[%s392 + $0x1e8] sm:$0xff] %v515
                  %v517 = vld [vmem:[%s391 + $0x3e0] sm:$0xff]
                  %518 = vst [vmem:[%s392 + $0x1f0] sm:$0xff] %v517
                  %v519 = vld [vmem:[%s391 + $0x3f0] sm:$0xff]
                  %520 = vst [vmem:[%s392 + $0x1f8] sm:$0xff] %v519
                $region60: #{resblock_forward.1} parent=54 // loop_footer
                  %s390 = sadd.s32 1, %s386
                $region61: #{resblock_forward.1} parent=54 // loop_footer_branch
                  %385 = sbr.rel target = $region57
                $region62: #{resblock_forward.1} parent=54 // loop_exit
                  _
              $region55: #{resblock_forward.1} parent=39 // pred_fallthru
                _
              // Predicated region
              $region63: #{resblock_forward.1} parent=39 // pred_check
                _
              $region64: #{resblock_forward.1} parent=39 // pred_check_branch
                %522 = sbr.rel target = $region66
              $region65: #{resblock_forward.1} parent=39 // pred_region
                _
              $region66: #{resblock_forward.1} parent=39 // pred_fallthru
                _
            $region40: #{resblock_forward.1} parent=35 // pred_fallthru
              _
            // Predicated region
            $region41: #{resblock_forward.1} parent=35 // pred_check
              _
            $region42: #{resblock_forward.1} parent=35 // pred_check_branch
              %245 = sbr.rel target = $region44
            $region43: #{resblock_forward.1} parent=35 // pred_region
              loop: start=0, step=1, limit=1
              $region45: #{resblock_forward.1} parent=43 // loop_pre_header
                _
              $region46: #{resblock_forward.1} parent=43 // loop_header
                %s248 = sphi 0, %s252
                %p249 = scmp.ge.s32.totalorder %s248, 1
                %s253 = sphi %s239, %s239
                %s254 = sphi %s236, %s236
              $region47: #{resblock_forward.1} parent=43 // loop_header_branch
                %251 = sbr.rel (%p249) target = $region51
              $region48: #{resblock_forward.1} parent=43 // loop_body
                %v255 = vld [vmem:[%s253] sm:$0xff]
                %256 = vst [vmem:[%s254] sm:$0xff] %v255
                %v257 = vld [vmem:[%s253 + $0x10] sm:$0xff]
                %258 = vst [vmem:[%s254 + $0x8] sm:$0xff] %v257
                %v259 = vld [vmem:[%s253 + $0x20] sm:$0xff]
                %260 = vst [vmem:[%s254 + $0x10] sm:$0xff] %v259
                %v261 = vld [vmem:[%s253 + $0x30] sm:$0xff]
                %262 = vst [vmem:[%s254 + $0x18] sm:$0xff] %v261
                %v263 = vld [vmem:[%s253 + $0x40] sm:$0xff]
                %264 = vst [vmem:[%s254 + $0x20] sm:$0xff] %v263
                %v265 = vld [vmem:[%s253 + $0x50] sm:$0xff]
                %266 = vst [vmem:[%s254 + $0x28] sm:$0xff] %v265
                %v267 = vld [vmem:[%s253 + $0x60] sm:$0xff]
                %268 = vst [vmem:[%s254 + $0x30] sm:$0xff] %v267
                %v269 = vld [vmem:[%s253 + $0x70] sm:$0xff]
                %270 = vst [vmem:[%s254 + $0x38] sm:$0xff] %v269
                %v271 = vld [vmem:[%s253 + $0x80] sm:$0xff]
                %272 = vst [vmem:[%s254 + $0x40] sm:$0xff] %v271
                %v273 = vld [vmem:[%s253 + $0x90] sm:$0xff]
                %274 = vst [vmem:[%s254 + $0x48] sm:$0xff] %v273
                %v275 = vld [vmem:[%s253 + $0xa0] sm:$0xff]
                %276 = vst [vmem:[%s254 + $0x50] sm:$0xff] %v275
                %v277 = vld [vmem:[%s253 + $0xb0] sm:$0xff]
                %278 = vst [vmem:[%s254 + $0x58] sm:$0xff] %v277
                %v279 = vld [vmem:[%s253 + $0xc0] sm:$0xff]
                %280 = vst [vmem:[%s254 + $0x60] sm:$0xff] %v279
                %v281 = vld [vmem:[%s253 + $0xd0] sm:$0xff]
                %282 = vst [vmem:[%s254 + $0x68] sm:$0xff] %v281
                %v283 = vld [vmem:[%s253 + $0xe0] sm:$0xff]
                %284 = vst [vmem:[%s254 + $0x70] sm:$0xff] %v283
                %v285 = vld [vmem:[%s253 + $0xf0] sm:$0xff]
                %286 = vst [vmem:[%s254 + $0x78] sm:$0xff] %v285
                %v287 = vld [vmem:[%s253 + $0x100] sm:$0xff]
                %288 = vst [vmem:[%s254 + $0x80] sm:$0xff] %v287
                %v289 = vld [vmem:[%s253 + $0x110] sm:$0xff]
                %290 = vst [vmem:[%s254 + $0x88] sm:$0xff] %v289
                %v291 = vld [vmem:[%s253 + $0x120] sm:$0xff]
                %292 = vst [vmem:[%s254 + $0x90] sm:$0xff] %v291
                %v293 = vld [vmem:[%s253 + $0x130] sm:$0xff]
                %294 = vst [vmem:[%s254 + $0x98] sm:$0xff] %v293
                %v295 = vld [vmem:[%s253 + $0x140] sm:$0xff]
                %296 = vst [vmem:[%s254 + $0xa0] sm:$0xff] %v295
                %v297 = vld [vmem:[%s253 + $0x150] sm:$0xff]
                %298 = vst [vmem:[%s254 + $0xa8] sm:$0xff] %v297
                %v299 = vld [vmem:[%s253 + $0x160] sm:$0xff]
                %300 = vst [vmem:[%s254 + $0xb0] sm:$0xff] %v299
                %v301 = vld [vmem:[%s253 + $0x170] sm:$0xff]
                %302 = vst [vmem:[%s254 + $0xb8] sm:$0xff] %v301
                %v303 = vld [vmem:[%s253 + $0x180] sm:$0xff]
                %304 = vst [vmem:[%s254 + $0xc0] sm:$0xff] %v303
                %v305 = vld [vmem:[%s253 + $0x190] sm:$0xff]
                %306 = vst [vmem:[%s254 + $0xc8] sm:$0xff] %v305
                %v307 = vld [vmem:[%s253 + $0x1a0] sm:$0xff]
                %308 = vst [vmem:[%s254 + $0xd0] sm:$0xff] %v307
                %v309 = vld [vmem:[%s253 + $0x1b0] sm:$0xff]
                %310 = vst [vmem:[%s254 + $0xd8] sm:$0xff] %v309
                %v311 = vld [vmem:[%s253 + $0x1c0] sm:$0xff]
                %312 = vst [vmem:[%s254 + $0xe0] sm:$0xff] %v311
                %v313 = vld [vmem:[%s253 + $0x1d0] sm:$0xff]
                %314 = vst [vmem:[%s254 + $0xe8] sm:$0xff] %v313
                %v315 = vld [vmem:[%s253 + $0x1e0] sm:$0xff]
                %316 = vst [vmem:[%s254 + $0xf0] sm:$0xff] %v315
                %v317 = vld [vmem:[%s253 + $0x1f0] sm:$0xff]
                %318 = vst [vmem:[%s254 + $0xf8] sm:$0xff] %v317
                %v319 = vld [vmem:[%s253 + $0x200] sm:$0xff]
                %320 = vst [vmem:[%s254 + $0x100] sm:$0xff] %v319
                %v321 = vld [vmem:[%s253 + $0x210] sm:$0xff]
                %322 = vst [vmem:[%s254 + $0x108] sm:$0xff] %v321
                %v323 = vld [vmem:[%s253 + $0x220] sm:$0xff]
                %324 = vst [vmem:[%s254 + $0x110] sm:$0xff] %v323
                %v325 = vld [vmem:[%s253 + $0x230] sm:$0xff]
                %326 = vst [vmem:[%s254 + $0x118] sm:$0xff] %v325
                %v327 = vld [vmem:[%s253 + $0x240] sm:$0xff]
                %328 = vst [vmem:[%s254 + $0x120] sm:$0xff] %v327
                %v329 = vld [vmem:[%s253 + $0x250] sm:$0xff]
                %330 = vst [vmem:[%s254 + $0x128] sm:$0xff] %v329
                %v331 = vld [vmem:[%s253 + $0x260] sm:$0xff]
                %332 = vst [vmem:[%s254 + $0x130] sm:$0xff] %v331
                %v333 = vld [vmem:[%s253 + $0x270] sm:$0xff]
                %334 = vst [vmem:[%s254 + $0x138] sm:$0xff] %v333
                %v335 = vld [vmem:[%s253 + $0x280] sm:$0xff]
                %336 = vst [vmem:[%s254 + $0x140] sm:$0xff] %v335
                %v337 = vld [vmem:[%s253 + $0x290] sm:$0xff]
                %338 = vst [vmem:[%s254 + $0x148] sm:$0xff] %v337
                %v339 = vld [vmem:[%s253 + $0x2a0] sm:$0xff]
                %340 = vst [vmem:[%s254 + $0x150] sm:$0xff] %v339
                %v341 = vld [vmem:[%s253 + $0x2b0] sm:$0xff]
                %342 = vst [vmem:[%s254 + $0x158] sm:$0xff] %v341
                %v343 = vld [vmem:[%s253 + $0x2c0] sm:$0xff]
                %344 = vst [vmem:[%s254 + $0x160] sm:$0xff] %v343
                %v345 = vld [vmem:[%s253 + $0x2d0] sm:$0xff]
                %346 = vst [vmem:[%s254 + $0x168] sm:$0xff] %v345
                %v347 = vld [vmem:[%s253 + $0x2e0] sm:$0xff]
                %348 = vst [vmem:[%s254 + $0x170] sm:$0xff] %v347
                %v349 = vld [vmem:[%s253 + $0x2f0] sm:$0xff]
                %350 = vst [vmem:[%s254 + $0x178] sm:$0xff] %v349
                %v351 = vld [vmem:[%s253 + $0x300] sm:$0xff]
                %352 = vst [vmem:[%s254 + $0x180] sm:$0xff] %v351
                %v353 = vld [vmem:[%s253 + $0x310] sm:$0xff]
                %354 = vst [vmem:[%s254 + $0x188] sm:$0xff] %v353
                %v355 = vld [vmem:[%s253 + $0x320] sm:$0xff]
                %356 = vst [vmem:[%s254 + $0x190] sm:$0xff] %v355
                %v357 = vld [vmem:[%s253 + $0x330] sm:$0xff]
                %358 = vst [vmem:[%s254 + $0x198] sm:$0xff] %v357
                %v359 = vld [vmem:[%s253 + $0x340] sm:$0xff]
                %360 = vst [vmem:[%s254 + $0x1a0] sm:$0xff] %v359
                %v361 = vld [vmem:[%s253 + $0x350] sm:$0xff]
                %362 = vst [vmem:[%s254 + $0x1a8] sm:$0xff] %v361
                %v363 = vld [vmem:[%s253 + $0x360] sm:$0xff]
                %364 = vst [vmem:[%s254 + $0x1b0] sm:$0xff] %v363
                %v365 = vld [vmem:[%s253 + $0x370] sm:$0xff]
                %366 = vst [vmem:[%s254 + $0x1b8] sm:$0xff] %v365
                %v367 = vld [vmem:[%s253 + $0x380] sm:$0xff]
                %368 = vst [vmem:[%s254 + $0x1c0] sm:$0xff] %v367
                %v369 = vld [vmem:[%s253 + $0x390] sm:$0xff]
                %370 = vst [vmem:[%s254 + $0x1c8] sm:$0xff] %v369
                %v371 = vld [vmem:[%s253 + $0x3a0] sm:$0xff]
                %372 = vst [vmem:[%s254 + $0x1d0] sm:$0xff] %v371
                %v373 = vld [vmem:[%s253 + $0x3b0] sm:$0xff]
                %374 = vst [vmem:[%s254 + $0x1d8] sm:$0xff] %v373
                %v375 = vld [vmem:[%s253 + $0x3c0] sm:$0xff]
                %376 = vst [vmem:[%s254 + $0x1e0] sm:$0xff] %v375
                %v377 = vld [vmem:[%s253 + $0x3d0] sm:$0xff]
                %378 = vst [vmem:[%s254 + $0x1e8] sm:$0xff] %v377
                %v379 = vld [vmem:[%s253 + $0x3e0] sm:$0xff]
                %380 = vst [vmem:[%s254 + $0x1f0] sm:$0xff] %v379
                %v381 = vld [vmem:[%s253 + $0x3f0] sm:$0xff]
                %382 = vst [vmem:[%s254 + $0x1f8] sm:$0xff] %v381
              $region49: #{resblock_forward.1} parent=43 // loop_footer
                %s252 = sadd.s32 1, %s248
              $region50: #{resblock_forward.1} parent=43 // loop_footer_branch
                %247 = sbr.rel target = $region46
              $region51: #{resblock_forward.1} parent=43 // loop_exit
                _
            $region44: #{resblock_forward.1} parent=35 // pred_fallthru
              _
          $region36: #{resblock_forward.1} parent=31 // pred_fallthru
            _
          %523 = vnop
        $region32: #{resblock_forward.1} parent=27 // pred_fallthru
          _
        // Predicated region
        $region67: #{resblock_forward.1} parent=27 // pred_check
          %p524 = pneg %p81
        $region68: #{resblock_forward.1} parent=27 // pred_check_branch
          %526 = sbr.rel (%p524) target = $region70
        $region69: #{resblock_forward.1} parent=27 // pred_region
          %s527 = smul.u32 2, %s14
          %p528 = scmp.lt.s32.totalorder %s527, 3
          %s529 = scalar_select %p528, %s527, 3
          %s530 = scalar_lea.vmem %s2, %s529
          %s531 = smul.u32 2, %s14
        $region70: #{resblock_forward.1} parent=27 // pred_fallthru
          _
        // Predicated region
        $region71: #{resblock_forward.1} parent=27 // pred_check
          %p532 = pneg %p107
        $region72: #{resblock_forward.1} parent=27 // pred_check_branch
          %534 = sbr.rel (%p532) target = $region74
        $region73: #{resblock_forward.1} parent=27 // pred_region
          %s535 = smul.u32 2, %s14
          %p536 = scmp.lt.s32.totalorder %s535, 3
          %s537 = scalar_select %p536, %s535, 3
          %s538 = scalar_lea.vmem %s3, %s537
          %s539 = smul.u32 2, %s14
        $region74: #{resblock_forward.1} parent=27 // pred_fallthru
          _
        // Predicated region
        $region75: #{resblock_forward.1} parent=27 // pred_check
          %p540 = pneg %p133
        $region76: #{resblock_forward.1} parent=27 // pred_check_branch
          %542 = sbr.rel (%p540) target = $region78
        $region77: #{resblock_forward.1} parent=27 // pred_region
          %s543 = smul.u32 32, %s14
          %p544 = scmp.lt.s32.totalorder %s543, 63
          %s545 = scalar_select %p544, %s543, 63
          %s546 = smul.addr %s545, 4
          %s547 = smul.addr %s546, 4
          %s548 = scalar_lea.vmem %s4, %s547
          %s549 = smul.u32 32, %s14
        $region78: #{resblock_forward.1} parent=27 // pred_fallthru
          _
      $region28: #{resblock_forward.1} parent=5 // pred_fallthru
        _
      %p550 = scmp.le.s32.totalorder 1, %s14
      %p551 = scmp.lt.s32.totalorder %s14, 3
      %p552 = pnand %p550, %p551
      %p553 = pneg %p552
      // Predicated region
      $region79: #{resblock_forward.1} parent=5 // pred_check
        _
      $region80: #{resblock_forward.1} parent=5 // pred_check_branch
        %555 = sbr.rel (%p552) target = $region82
      $region81: #{resblock_forward.1} parent=5 // pred_region
        %s556 = ssub.s32 %s14, 1
        %s557 = sand.u32 %s48, 1
        %s558 = sand.u32 %s48, 1
        %s559 = smul.addr %s558, 512
        %s560 = scalar_lea.vmem [#allocation3], %s559
        // Predicated region
        $region83: #{resblock_forward.1} parent=81 // pred_check
          %p561 = pneg %p61
        $region84: #{resblock_forward.1} parent=81 // pred_check_branch
          %563 = sbr.rel (%p561) target = $region86
        $region85: #{resblock_forward.1} parent=81 // pred_region
          _
        $region86: #{resblock_forward.1} parent=81 // pred_fallthru
          _
        %p564 = pneg %p35
        %p565 = pneg %p32
        %s566 = sand.u32 %s48, 1
        %s567 = sand.u32 %s48, 1
        %s568 = smul.addr %s567, 512
        %s569 = scalar_lea.vmem [#allocation3], %s568
        %p570 = pneg %p61
        %p571 = pneg %p58
        %s572 = smul.u32 2, %s19
        %p573 = scmp.lt.s32.totalorder %s572, 3
        %s574 = scalar_select %p573, %s572, 3
        %s575 = scalar_lea.vmem %s2, %s574
        %p576 = pneg %p87
        %p577 = pneg %p84
        %s578 = smul.u32 2, %s19
        %p579 = scmp.lt.s32.totalorder %s578, 3
        %s580 = scalar_select %p579, %s578, 3
        %s581 = scalar_lea.vmem %s3, %s580
        %p582 = pneg %p113
        %p583 = pneg %p110
        %s584 = smul.u32 32, %s19
        %p585 = scmp.lt.s32.totalorder %s584, 63
        %s586 = scalar_select %p585, %s584, 63
        %s587 = smul.addr %s586, 4
        %s588 = smul.addr %s587, 4
        %s589 = scalar_lea.vmem %s4, %s588
        %p590 = pneg %p139
        %p591 = pneg %p136
        %p592 = pneg %p160
        %p593 = pneg %p157
        %p594 = pneg %p181
        %p595 = pneg %p178
        %p596 = pneg %p202
        %p597 = pneg %p199
        %s598 = smul.u32 2, %s19
        %s599 = smul.u32 2, %s19
        %p600 = scmp.lt.s32.totalorder %s599, 3
        %s601 = scalar_select %p600, %s599, 3
        %s602 = scalar_lea.vmem %s2, %s601
        %s603 = smul.u32 2, %s19
        %s604 = smul.u32 2, %s19
        %p605 = scmp.lt.s32.totalorder %s604, 3
        %s606 = scalar_select %p605, %s604, 3
        %s607 = scalar_lea.vmem %s3, %s606
        %s608 = smul.u32 2, %s19
        %s609 = smul.u32 32, %s19
        %p610 = scmp.lt.s32.totalorder %s609, 63
        %s611 = scalar_select %p610, %s609, 63
        %s612 = smul.addr %s611, 4
        %s613 = smul.addr %s612, 4
        %s614 = scalar_lea.vmem %s4, %s613
        %s615 = smul.u32 32, %s19
        %p616 = scmp.eq.s32.totalorder %s19, 0
        // Predicated region
        $region87: #{resblock_forward.1} parent=81 // pred_check
          %p617 = pneg %p616
        $region88: #{resblock_forward.1} parent=81 // pred_check_branch
          %619 = sbr.rel (%p617) target = $region90
        $region89: #{resblock_forward.1} parent=81 // pred_region
          %620 = vst [vmem:[#allocation2] sm:$0xff] 0.0
          %621 = vst [vmem:[#allocation2 + $0x8] sm:$0xff] 0.0
          %622 = vst [vmem:[#allocation2 + $0x10] sm:$0xff] 0.0
          %623 = vst [vmem:[#allocation2 + $0x18] sm:$0xff] 0.0
        $region90: #{resblock_forward.1} parent=81 // pred_fallthru
          _
        %v624 = vld [vmem:[%s0] sm:$0xff]
        %v625 = vld [vmem:[%s0 + $0x8] sm:$0xff]
        %v626 = vld [vmem:[%s0 + $0x10] sm:$0xff]
        %v627 = vld [vmem:[%s0 + $0x18] sm:$0xff]
        %v628 = vpack.c.bf16 %v624, %v624
        %v629 = vpack.c.bf16 %v625, %v625
        %v630 = vpack.c.bf16 %v626, %v626
        %v631 = vpack.c.bf16 %v627, %v627
        %v632 = vld [vmem:[%s560] sm:$0xff]
        %v633 = vld [vmem:[%s560 + $0x8] sm:$0xff]
        %v634 = vld [vmem:[%s560 + $0x10] sm:$0xff]
        %v635 = vld [vmem:[%s560 + $0x18] sm:$0xff]
        %v636 = vld [vmem:[%s560 + $0x20] sm:$0xff]
        %v637 = vld [vmem:[%s560 + $0x28] sm:$0xff]
        %v638 = vld [vmem:[%s560 + $0x30] sm:$0xff]
        %v639 = vld [vmem:[%s560 + $0x38] sm:$0xff]
        %v640 = vld [vmem:[%s560 + $0x40] sm:$0xff]
        %v641 = vld [vmem:[%s560 + $0x48] sm:$0xff]
        %v642 = vld [vmem:[%s560 + $0x50] sm:$0xff]
        %v643 = vld [vmem:[%s560 + $0x58] sm:$0xff]
        %v644 = vld [vmem:[%s560 + $0x60] sm:$0xff]
        %v645 = vld [vmem:[%s560 + $0x68] sm:$0xff]
        %v646 = vld [vmem:[%s560 + $0x70] sm:$0xff]
        %v647 = vld [vmem:[%s560 + $0x78] sm:$0xff]
        %v648 = vld [vmem:[%s560 + $0x80] sm:$0xff]
        %v649 = vld [vmem:[%s560 + $0x88] sm:$0xff]
        %v650 = vld [vmem:[%s560 + $0x90] sm:$0xff]
        %v651 = vld [vmem:[%s560 + $0x98] sm:$0xff]
        %v652 = vld [vmem:[%s560 + $0xa0] sm:$0xff]
        %v653 = vld [vmem:[%s560 + $0xa8] sm:$0xff]
        %v654 = vld [vmem:[%s560 + $0xb0] sm:$0xff]
        %v655 = vld [vmem:[%s560 + $0xb8] sm:$0xff]
        %v656 = vld [vmem:[%s560 + $0xc0] sm:$0xff]
        %v657 = vld [vmem:[%s560 + $0xc8] sm:$0xff]
        %v658 = vld [vmem:[%s560 + $0xd0] sm:$0xff]
        %v659 = vld [vmem:[%s560 + $0xd8] sm:$0xff]
        %v660 = vld [vmem:[%s560 + $0xe0] sm:$0xff]
        %v661 = vld [vmem:[%s560 + $0xe8] sm:$0xff]
        %v662 = vld [vmem:[%s560 + $0xf0] sm:$0xff]
        %v663 = vld [vmem:[%s560 + $0xf8] sm:$0xff]
        %v664 = vld [vmem:[%s560 + $0x100] sm:$0xff]
        %v665 = vld [vmem:[%s560 + $0x108] sm:$0xff]
        %v666 = vld [vmem:[%s560 + $0x110] sm:$0xff]
        %v667 = vld [vmem:[%s560 + $0x118] sm:$0xff]
        %v668 = vld [vmem:[%s560 + $0x120] sm:$0xff]
        %v669 = vld [vmem:[%s560 + $0x128] sm:$0xff]
        %v670 = vld [vmem:[%s560 + $0x130] sm:$0xff]
        %v671 = vld [vmem:[%s560 + $0x138] sm:$0xff]
        %v672 = vld [vmem:[%s560 + $0x140] sm:$0xff]
        %v673 = vld [vmem:[%s560 + $0x148] sm:$0xff]
        %v674 = vld [vmem:[%s560 + $0x150] sm:$0xff]
        %v675 = vld [vmem:[%s560 + $0x158] sm:$0xff]
        %v676 = vld [vmem:[%s560 + $0x160] sm:$0xff]
        %v677 = vld [vmem:[%s560 + $0x168] sm:$0xff]
        %v678 = vld [vmem:[%s560 + $0x170] sm:$0xff]
        %v679 = vld [vmem:[%s560 + $0x178] sm:$0xff]
        %v680 = vld [vmem:[%s560 + $0x180] sm:$0xff]
        %v681 = vld [vmem:[%s560 + $0x188] sm:$0xff]
        %v682 = vld [vmem:[%s560 + $0x190] sm:$0xff]
        %v683 = vld [vmem:[%s560 + $0x198] sm:$0xff]
        %v684 = vld [vmem:[%s560 + $0x1a0] sm:$0xff]
        %v685 = vld [vmem:[%s560 + $0x1a8] sm:$0xff]
        %v686 = vld [vmem:[%s560 + $0x1b0] sm:$0xff]
        %v687 = vld [vmem:[%s560 + $0x1b8] sm:$0xff]
        %v688 = vld [vmem:[%s560 + $0x1c0] sm:$0xff]
        %v689 = vld [vmem:[%s560 + $0x1c8] sm:$0xff]
        %v690 = vld [vmem:[%s560 + $0x1d0] sm:$0xff]
        %v691 = vld [vmem:[%s560 + $0x1d8] sm:$0xff]
        %v692 = vld [vmem:[%s560 + $0x1e0] sm:$0xff]
        %v693 = vld [vmem:[%s560 + $0x1e8] sm:$0xff]
        %v694 = vld [vmem:[%s560 + $0x1f0] sm:$0xff]
        %v695 = vld [vmem:[%s560 + $0x1f8] sm:$0xff]
        %v760 = vunpack.c.l.b16 %v632
        %v761 = vunpack.c.h.b16 %v632
        %v762 = vunpack.c.l.b16 %v633
        %v763 = vunpack.c.h.b16 %v633
        %v764 = vunpack.c.l.b16 %v634
        %v765 = vunpack.c.h.b16 %v634
        %v766 = vunpack.c.l.b16 %v635
        %v767 = vunpack.c.h.b16 %v635
        %v768 = vunpack.c.l.b16 %v636
        %v769 = vunpack.c.h.b16 %v636
        %v770 = vunpack.c.l.b16 %v637
        %v771 = vunpack.c.h.b16 %v637
        %v772 = vunpack.c.l.b16 %v638
        %v773 = vunpack.c.h.b16 %v638
        %v774 = vunpack.c.l.b16 %v639
        %v775 = vunpack.c.h.b16 %v639
        %v776 = vunpack.c.l.b16 %v640
        %v777 = vunpack.c.h.b16 %v640
        %v778 = vunpack.c.l.b16 %v641
        %v779 = vunpack.c.h.b16 %v641
        %v780 = vunpack.c.l.b16 %v642
        %v781 = vunpack.c.h.b16 %v642
        %v782 = vunpack.c.l.b16 %v643
        %v783 = vunpack.c.h.b16 %v643
        %v784 = vunpack.c.l.b16 %v644
        %v785 = vunpack.c.h.b16 %v644
        %v786 = vunpack.c.l.b16 %v645
        %v787 = vunpack.c.h.b16 %v645
        %v788 = vunpack.c.l.b16 %v646
        %v789 = vunpack.c.h.b16 %v646
        %v790 = vunpack.c.l.b16 %v647
        %v791 = vunpack.c.h.b16 %v647
        %v792 = vunpack.c.l.b16 %v648
        %v793 = vunpack.c.h.b16 %v648
        %v794 = vunpack.c.l.b16 %v649
        %v795 = vunpack.c.h.b16 %v649
        %v796 = vunpack.c.l.b16 %v650
        %v797 = vunpack.c.h.b16 %v650
        %v798 = vunpack.c.l.b16 %v651
        %v799 = vunpack.c.h.b16 %v651
        %v800 = vunpack.c.l.b16 %v652
        %v801 = vunpack.c.h.b16 %v652
        %v802 = vunpack.c.l.b16 %v653
        %v803 = vunpack.c.h.b16 %v653
        %v804 = vunpack.c.l.b16 %v654
        %v805 = vunpack.c.h.b16 %v654
        %v806 = vunpack.c.l.b16 %v655
        %v807 = vunpack.c.h.b16 %v655
        %v808 = vunpack.c.l.b16 %v656
        %v809 = vunpack.c.h.b16 %v656
        %v810 = vunpack.c.l.b16 %v657
        %v811 = vunpack.c.h.b16 %v657
        %v812 = vunpack.c.l.b16 %v658
        %v813 = vunpack.c.h.b16 %v658
        %v814 = vunpack.c.l.b16 %v659
        %v815 = vunpack.c.h.b16 %v659
        %v816 = vunpack.c.l.b16 %v660
        %v817 = vunpack.c.h.b16 %v660
        %v818 = vunpack.c.l.b16 %v661
        %v819 = vunpack.c.h.b16 %v661
        %v820 = vunpack.c.l.b16 %v662
        %v821 = vunpack.c.h.b16 %v662
        %v822 = vunpack.c.l.b16 %v663
        %v823 = vunpack.c.h.b16 %v663
        %v824 = vunpack.c.l.b16 %v664
        %v825 = vunpack.c.h.b16 %v664
        %v826 = vunpack.c.l.b16 %v665
        %v827 = vunpack.c.h.b16 %v665
        %v828 = vunpack.c.l.b16 %v666
        %v829 = vunpack.c.h.b16 %v666
        %v830 = vunpack.c.l.b16 %v667
        %v831 = vunpack.c.h.b16 %v667
        %v832 = vunpack.c.l.b16 %v668
        %v833 = vunpack.c.h.b16 %v668
        %v834 = vunpack.c.l.b16 %v669
        %v835 = vunpack.c.h.b16 %v669
        %v836 = vunpack.c.l.b16 %v670
        %v837 = vunpack.c.h.b16 %v670
        %v838 = vunpack.c.l.b16 %v671
        %v839 = vunpack.c.h.b16 %v671
        %v840 = vunpack.c.l.b16 %v672
        %v841 = vunpack.c.h.b16 %v672
        %v842 = vunpack.c.l.b16 %v673
        %v843 = vunpack.c.h.b16 %v673
        %v844 = vunpack.c.l.b16 %v674
        %v845 = vunpack.c.h.b16 %v674
        %v846 = vunpack.c.l.b16 %v675
        %v847 = vunpack.c.h.b16 %v675
        %v848 = vunpack.c.l.b16 %v676
        %v849 = vunpack.c.h.b16 %v676
        %v850 = vunpack.c.l.b16 %v677
        %v851 = vunpack.c.h.b16 %v677
        %v852 = vunpack.c.l.b16 %v678
        %v853 = vunpack.c.h.b16 %v678
        %v854 = vunpack.c.l.b16 %v679
        %v855 = vunpack.c.h.b16 %v679
        %v856 = vunpack.c.l.b16 %v680
        %v857 = vunpack.c.h.b16 %v680
        %v858 = vunpack.c.l.b16 %v681
        %v859 = vunpack.c.h.b16 %v681
        %v860 = vunpack.c.l.b16 %v682
        %v861 = vunpack.c.h.b16 %v682
        %v862 = vunpack.c.l.b16 %v683
        %v863 = vunpack.c.h.b16 %v683
        %v864 = vunpack.c.l.b16 %v684
        %v865 = vunpack.c.h.b16 %v684
        %v866 = vunpack.c.l.b16 %v685
        %v867 = vunpack.c.h.b16 %v685
        %v868 = vunpack.c.l.b16 %v686
        %v869 = vunpack.c.h.b16 %v686
        %v870 = vunpack.c.l.b16 %v687
        %v871 = vunpack.c.h.b16 %v687
        %v872 = vunpack.c.l.b16 %v688
        %v873 = vunpack.c.h.b16 %v688
        %v874 = vunpack.c.l.b16 %v689
        %v875 = vunpack.c.h.b16 %v689
        %v876 = vunpack.c.l.b16 %v690
        %v877 = vunpack.c.h.b16 %v690
        %v878 = vunpack.c.l.b16 %v691
        %v879 = vunpack.c.h.b16 %v691
        %v880 = vunpack.c.l.b16 %v692
        %v881 = vunpack.c.h.b16 %v692
        %v882 = vunpack.c.l.b16 %v693
        %v883 = vunpack.c.h.b16 %v693
        %v884 = vunpack.c.l.b16 %v694
        %v885 = vunpack.c.h.b16 %v694
        %v886 = vunpack.c.l.b16 %v695
        %v887 = vunpack.c.h.b16 %v695
        %v888 = vpack.c.b16 %v762, %v760
        %v889 = vpack.c.b16 %v763, %v761
        %v890 = vpack.c.b16 %v766, %v764
        %v891 = vpack.c.b16 %v767, %v765
        %v892 = vpack.c.b16 %v770, %v768
        %v893 = vpack.c.b16 %v771, %v769
        %v894 = vpack.c.b16 %v774, %v772
        %v895 = vpack.c.b16 %v775, %v773
        %v896 = vpack.c.b16 %v778, %v776
        %v897 = vpack.c.b16 %v779, %v777
        %v898 = vpack.c.b16 %v782, %v780
        %v899 = vpack.c.b16 %v783, %v781
        %v900 = vpack.c.b16 %v786, %v784
        %v901 = vpack.c.b16 %v787, %v785
        %v902 = vpack.c.b16 %v790, %v788
        %v903 = vpack.c.b16 %v791, %v789
        %v904 = vpack.c.b16 %v794, %v792
        %v905 = vpack.c.b16 %v795, %v793
        %v906 = vpack.c.b16 %v798, %v796
        %v907 = vpack.c.b16 %v799, %v797
        %v908 = vpack.c.b16 %v802, %v800
        %v909 = vpack.c.b16 %v803, %v801
        %v910 = vpack.c.b16 %v806, %v804
        %v911 = vpack.c.b16 %v807, %v805
        %v912 = vpack.c.b16 %v810, %v808
        %v913 = vpack.c.b16 %v811, %v809
        %v914 = vpack.c.b16 %v814, %v812
        %v915 = vpack.c.b16 %v815, %v813
        %v916 = vpack.c.b16 %v818, %v816
        %v917 = vpack.c.b16 %v819, %v817
        %v918 = vpack.c.b16 %v822, %v820
        %v919 = vpack.c.b16 %v823, %v821
        %v920 = vpack.c.b16 %v826, %v824
        %v921 = vpack.c.b16 %v827, %v825
        %v922 = vpack.c.b16 %v830, %v828
        %v923 = vpack.c.b16 %v831, %v829
        %v924 = vpack.c.b16 %v834, %v832
        %v925 = vpack.c.b16 %v835, %v833
        %v926 = vpack.c.b16 %v838, %v836
        %v927 = vpack.c.b16 %v839, %v837
        %v928 = vpack.c.b16 %v842, %v840
        %v929 = vpack.c.b16 %v843, %v841
        %v930 = vpack.c.b16 %v846, %v844
        %v931 = vpack.c.b16 %v847, %v845
        %v932 = vpack.c.b16 %v850, %v848
        %v933 = vpack.c.b16 %v851, %v849
        %v934 = vpack.c.b16 %v854, %v852
        %v935 = vpack.c.b16 %v855, %v853
        %v936 = vpack.c.b16 %v858, %v856
        %v937 = vpack.c.b16 %v859, %v857
        %v938 = vpack.c.b16 %v862, %v860
        %v939 = vpack.c.b16 %v863, %v861
        %v940 = vpack.c.b16 %v866, %v864
        %v941 = vpack.c.b16 %v867, %v865
        %v942 = vpack.c.b16 %v870, %v868
        %v943 = vpack.c.b16 %v871, %v869
        %v944 = vpack.c.b16 %v874, %v872
        %v945 = vpack.c.b16 %v875, %v873
        %v946 = vpack.c.b16 %v878, %v876
        %v947 = vpack.c.b16 %v879, %v877
        %v948 = vpack.c.b16 %v882, %v880
        %v949 = vpack.c.b16 %v883, %v881
        %v950 = vpack.c.b16 %v886, %v884
        %v951 = vpack.c.b16 %v887, %v885
        %1016 = vmatprep.subr.bf16.mxu0 %v889
        %1017 = vmatpush1.bf16.msra.mxu0 %v888
        %1018 = vmatprep.subr.bf16.mxu0 %v891
        %1019 = vmatpush1.bf16.msra.mxu0 %v890
        %1020 = vmatprep.subr.bf16.mxu0 %v893
        %1021 = vmatpush1.bf16.msra.mxu0 %v892
        %1022 = vmatprep.subr.bf16.mxu0 %v895
        %1023 = vmatpush1.bf16.msra.mxu0 %v894
        %1024 = vmatprep.subr.bf16.mxu0 %v897
        %1025 = vmatpush1.bf16.msra.mxu0 %v896
        %1026 = vmatprep.subr.bf16.mxu0 %v899
        %1027 = vmatpush1.bf16.msra.mxu0 %v898
        %1028 = vmatprep.subr.bf16.mxu0 %v901
        %1029 = vmatpush1.bf16.msra.mxu0 %v900
        %1030 = vmatprep.subr.bf16.mxu0 %v903
        %1031 = vmatpush1.bf16.msra.mxu0 %v902
        %1032 = vmatprep.subr.bf16.mxu0 %v905
        %1033 = vmatpush1.bf16.msra.mxu0 %v904
        %1034 = vmatprep.subr.bf16.mxu0 %v907
        %1035 = vmatpush1.bf16.msra.mxu0 %v906
        %1036 = vmatprep.subr.bf16.mxu0 %v909
        %1037 = vmatpush1.bf16.msra.mxu0 %v908
        %1038 = vmatprep.subr.bf16.mxu0 %v911
        %1039 = vmatpush1.bf16.msra.mxu0 %v910
        %1040 = vmatprep.subr.bf16.mxu0 %v913
        %1041 = vmatpush1.bf16.msra.mxu0 %v912
        %1042 = vmatprep.subr.bf16.mxu0 %v915
        %1043 = vmatpush1.bf16.msra.mxu0 %v914
        %1044 = vmatprep.subr.bf16.mxu0 %v917
        %1045 = vmatpush1.bf16.msra.mxu0 %v916
        %1046 = vmatprep.subr.bf16.mxu0 %v919
        %1047 = vmatpush1.bf16.msra.mxu0 %v918
        %1048 = vmatprep.mubr.bf16.mxu0 %v629
        %1049 = vmatmul.mubr.bf16.gmra.mrb[0].mxu0 %v628
        %v1050 = vpop.f32.mrb[0].mxu0
        %v1051 = vadd.f32 0.0, %v1050
        %v1052 = vpop.f32.mrb[0].mxu0
        %v1053 = vadd.f32 0.0, %v1052
        %v1054 = vpop.f32.mrb[0].mxu0
        %v1055 = vpop.f32.mrb[0].mxu0
        %1056 = vdwg.mxu0
        %1057 = vmatprep.subr.bf16.mxu0 %v921
        %1058 = vmatpush1.bf16.msra.mxu0 %v920
        %1059 = vmatprep.subr.bf16.mxu0 %v923
        %1060 = vmatpush1.bf16.msra.mxu0 %v922
        %1061 = vmatprep.subr.bf16.mxu0 %v925
        %1062 = vmatpush1.bf16.msra.mxu0 %v924
        %1063 = vmatprep.subr.bf16.mxu0 %v927
        %1064 = vmatpush1.bf16.msra.mxu0 %v926
        %1065 = vmatprep.subr.bf16.mxu0 %v929
        %1066 = vmatpush1.bf16.msra.mxu0 %v928
        %1067 = vmatprep.subr.bf16.mxu0 %v931
        %1068 = vmatpush1.bf16.msra.mxu0 %v930
        %1069 = vmatprep.subr.bf16.mxu0 %v933
        %1070 = vmatpush1.bf16.msra.mxu0 %v932
        %1071 = vmatprep.subr.bf16.mxu0 %v935
        %1072 = vmatpush1.bf16.msra.mxu0 %v934
        %1073 = vmatprep.subr.bf16.mxu0 %v937
        %1074 = vmatpush1.bf16.msra.mxu0 %v936
        %1075 = vmatprep.subr.bf16.mxu0 %v939
        %1076 = vmatpush1.bf16.msra.mxu0 %v938
        %1077 = vmatprep.subr.bf16.mxu0 %v941
        %1078 = vmatpush1.bf16.msra.mxu0 %v940
        %1079 = vmatprep.subr.bf16.mxu0 %v943
        %1080 = vmatpush1.bf16.msra.mxu0 %v942
        %1081 = vmatprep.subr.bf16.mxu0 %v945
        %1082 = vmatpush1.bf16.msra.mxu0 %v944
        %1083 = vmatprep.subr.bf16.mxu0 %v947
        %1084 = vmatpush1.bf16.msra.mxu0 %v946
        %1085 = vmatprep.subr.bf16.mxu0 %v949
        %1086 = vmatpush1.bf16.msra.mxu0 %v948
        %1087 = vmatprep.subr.bf16.mxu0 %v951
        %1088 = vmatpush1.bf16.msra.mxu0 %v950
        %1089 = vmatprep.mubr.bf16.mxu0 %v631
        %1090 = vmatmul.mubr.bf16.gmra.mrb[0].mxu0 %v630
        %v1091 = vpop.f32.mrb[0].mxu0
        %v1092 = vadd.f32 %v1051, %v1091
        %v1093 = vpop.f32.mrb[0].mxu0
        %v1094 = vadd.f32 %v1053, %v1093
        %v1095 = vpop.f32.mrb[0].mxu0
        %v1096 = vpop.f32.mrb[0].mxu0
        %1097 = vdwg.mxu0
        %v1098 = vrot.slane %v1092, 4
        %v1099 = vadd.f32 %v1092, %v1098
        %v1100 = vrot.slane %v1099, 2
        %v1101 = vadd.f32 %v1099, %v1100
        %v1102 = vrot.slane %v1101, 1
        %v1103 = vadd.f32 %v1101, %v1102
        %v1104 = vrot.slane %v1094, 4
        %v1105 = vadd.f32 %v1094, %v1104
        %v1106 = vrot.slane %v1105, 2
        %v1107 = vadd.f32 %v1105, %v1106
        %v1108 = vrot.slane %v1107, 1
        %v1109 = vadd.f32 %v1107, %v1108
        %v1110 = vmul.f32 %v1103, 0.125
        %v1111 = vmul.f32 %v1109, 0.125
        %v1112 = vmul.f32 %v1092, %v1092
        %v1113 = vmul.f32 %v1094, %v1094
        %v1114 = vrot.slane %v1112, 4
        %v1115 = vadd.f32 %v1112, %v1114
        %v1116 = vrot.slane %v1115, 2
        %v1117 = vadd.f32 %v1115, %v1116
        %v1118 = vrot.slane %v1117, 1
        %v1119 = vadd.f32 %v1117, %v1118
        %v1120 = vrot.slane %v1113, 4
        %v1121 = vadd.f32 %v1113, %v1120
        %v1122 = vrot.slane %v1121, 2
        %v1123 = vadd.f32 %v1121, %v1122
        %v1124 = vrot.slane %v1123, 1
        %v1125 = vadd.f32 %v1123, %v1124
        %v1126 = vmul.f32 %v1119, 0.125
        %v1127 = vmul.f32 %v1125, 0.125
        %v1128 = vmul.f32 %v1110, %v1110
        %v1129 = vmul.f32 %v1111, %v1111
        %v1130 = vsub.f32 %v1126, %v1128
        %v1131 = vsub.f32 %v1127, %v1129
        %v1132 = vmax.f32 %v1130, 0.0
        %v1133 = vmax.f32 %v1131, 0.0
        %v1134 = vld [vmem:[%s602] sm:$0x3]
        %v1135 = vadd.f32 %v1132, 1e-05
        %v1136 = vadd.f32 %v1133, 1e-05
        %v1137 = vrsqrt.pop %v1135
        %v1138 = vrsqrt.pop %v1136
        %v1141 = vcombine.low %v1137, %v1138
        %v1143 = vunpack.c.l.s4 1966171168
        %v1144 = vunpack.c.0.s8 %v1143
        %v1145 = vlaneseq
        %v1146 = vshrl.u32 %v1145, 7
        %v1147 = vsub.s32 %v1144, %v1146
        %v1148 = vrot.slane %v1141, %v1147
        %v1150 = vunpack.c.l.s4 1966171168
        %v1151 = vunpack.c.0.s8 %v1150
        %v1152 = vlaneseq
        %v1153 = vshrl.u32 %v1152, 7
        %v1154 = vsub.s32 %v1151, %v1153
        %v1155 = vrot.slane %v1148, %v1154
        %v1157 = vmul.f32 %v1134, %v1155
        %v1158 = vld [vmem:[%s607] sm:$0x3]
        %v1160 = vlaneseq
        %v1161 = vshrl.u32 %v1160, 7
        %v1162 = vsub.s32 0, %v1161
        %v1163 = vrot.slane %v1157, %v1162
        %v1164 = vlaneseq
        %v1165 = vshrl.u32 %v1164, 7
        %v1166 = vsub.s32 1, %v1165
        %v1167 = vrot.slane %v1157, %v1166
        %v1170 = vmul.f32 %v1110, %v1163
        %v1171 = vmul.f32 %v1111, %v1167
        %v1174 = vcombine.low %v1170, %v1171
        %v1176 = vunpack.c.l.s4 1966171168
        %v1177 = vunpack.c.0.s8 %v1176
        %v1178 = vlaneseq
        %v1179 = vshrl.u32 %v1178, 7
        %v1180 = vsub.s32 %v1177, %v1179
        %v1181 = vrot.slane %v1174, %v1180
        %v1183 = vunpack.c.l.s4 1966171168
        %v1184 = vunpack.c.0.s8 %v1183
        %v1185 = vlaneseq
        %v1186 = vshrl.u32 %v1185, 7
        %v1187 = vsub.s32 %v1184, %v1186
        %v1188 = vrot.slane %v1181, %v1187
        %v1190 = vsub.f32 %v1158, %v1188
        %v1191 = vmul.f32 %v1092, %v1163
        %v1192 = vmul.f32 %v1094, %v1167
        %v1194 = vlaneseq
        %v1195 = vshrl.u32 %v1194, 7
        %v1196 = vsub.s32 0, %v1195
        %v1197 = vrot.slane %v1190, %v1196
        %v1198 = vlaneseq
        %v1199 = vshrl.u32 %v1198, 7
        %v1200 = vsub.s32 1, %v1199
        %v1201 = vrot.slane %v1190, %v1200
        %v1204 = vadd.f32 %v1191, %v1197
        %v1205 = vadd.f32 %v1192, %v1201
        %v1206 = vmax.f32 %v1204, 0.0
        %v1207 = vmax.f32 %v1205, 0.0
        %v1208 = vld [vmem:[#allocation2] sm:$0xff]
        %v1209 = vld [vmem:[#allocation2 + $0x8] sm:$0xff]
        %v1210 = vld [vmem:[#allocation2 + $0x10] sm:$0xff]
        %v1211 = vld [vmem:[#allocation2 + $0x18] sm:$0xff]
        %v1212 = vpack.c.bf16 %v1206, %v1206
        %v1213 = vpack.c.bf16 %v1207, %v1207
        %v1214 = vld [vmem:[%s614] sm:$0xff]
        %v1215 = vld [vmem:[%s614 + $0x8] sm:$0xff]
        %v1216 = vld [vmem:[%s614 + $0x10] sm:$0xff]
        %v1217 = vld [vmem:[%s614 + $0x18] sm:$0xff]
        %v1218 = vld [vmem:[%s614 + $0x20] sm:$0xff]
        %v1219 = vld [vmem:[%s614 + $0x28] sm:$0xff]
        %v1220 = vld [vmem:[%s614 + $0x30] sm:$0xff]
        %v1221 = vld [vmem:[%s614 + $0x38] sm:$0xff]
        %v1222 = vld [vmem:[%s614 + $0x40] sm:$0xff]
        %v1223 = vld [vmem:[%s614 + $0x48] sm:$0xff]
        %v1224 = vld [vmem:[%s614 + $0x50] sm:$0xff]
        %v1225 = vld [vmem:[%s614 + $0x58] sm:$0xff]
        %v1226 = vld [vmem:[%s614 + $0x60] sm:$0xff]
        %v1227 = vld [vmem:[%s614 + $0x68] sm:$0xff]
        %v1228 = vld [vmem:[%s614 + $0x70] sm:$0xff]
        %v1229 = vld [vmem:[%s614 + $0x78] sm:$0xff]
        %v1230 = vld [vmem:[%s614 + $0x80] sm:$0xff]
        %v1231 = vld [vmem:[%s614 + $0x88] sm:$0xff]
        %v1232 = vld [vmem:[%s614 + $0x90] sm:$0xff]
        %v1233 = vld [vmem:[%s614 + $0x98] sm:$0xff]
        %v1234 = vld [vmem:[%s614 + $0xa0] sm:$0xff]
        %v1235 = vld [vmem:[%s614 + $0xa8] sm:$0xff]
        %v1236 = vld [vmem:[%s614 + $0xb0] sm:$0xff]
        %v1237 = vld [vmem:[%s614 + $0xb8] sm:$0xff]
        %v1238 = vld [vmem:[%s614 + $0xc0] sm:$0xff]
        %v1239 = vld [vmem:[%s614 + $0xc8] sm:$0xff]
        %v1240 = vld [vmem:[%s614 + $0xd0] sm:$0xff]
        %v1241 = vld [vmem:[%s614 + $0xd8] sm:$0xff]
        %v1242 = vld [vmem:[%s614 + $0xe0] sm:$0xff]
        %v1243 = vld [vmem:[%s614 + $0xe8] sm:$0xff]
        %v1244 = vld [vmem:[%s614 + $0xf0] sm:$0xff]
        %v1245 = vld [vmem:[%s614 + $0xf8] sm:$0xff]
        %v1246 = vld [vmem:[%s614 + $0x100] sm:$0xff]
        %v1247 = vld [vmem:[%s614 + $0x108] sm:$0xff]
        %v1248 = vld [vmem:[%s614 + $0x110] sm:$0xff]
        %v1249 = vld [vmem:[%s614 + $0x118] sm:$0xff]
        %v1250 = vld [vmem:[%s614 + $0x120] sm:$0xff]
        %v1251 = vld [vmem:[%s614 + $0x128] sm:$0xff]
        %v1252 = vld [vmem:[%s614 + $0x130] sm:$0xff]
        %v1253 = vld [vmem:[%s614 + $0x138] sm:$0xff]
        %v1254 = vld [vmem:[%s614 + $0x140] sm:$0xff]
        %v1255 = vld [vmem:[%s614 + $0x148] sm:$0xff]
        %v1256 = vld [vmem:[%s614 + $0x150] sm:$0xff]
        %v1257 = vld [vmem:[%s614 + $0x158] sm:$0xff]
        %v1258 = vld [vmem:[%s614 + $0x160] sm:$0xff]
        %v1259 = vld [vmem:[%s614 + $0x168] sm:$0xff]
        %v1260 = vld [vmem:[%s614 + $0x170] sm:$0xff]
        %v1261 = vld [vmem:[%s614 + $0x178] sm:$0xff]
        %v1262 = vld [vmem:[%s614 + $0x180] sm:$0xff]
        %v1263 = vld [vmem:[%s614 + $0x188] sm:$0xff]
        %v1264 = vld [vmem:[%s614 + $0x190] sm:$0xff]
        %v1265 = vld [vmem:[%s614 + $0x198] sm:$0xff]
        %v1266 = vld [vmem:[%s614 + $0x1a0] sm:$0xff]
        %v1267 = vld [vmem:[%s614 + $0x1a8] sm:$0xff]
        %v1268 = vld [vmem:[%s614 + $0x1b0] sm:$0xff]
        %v1269 = vld [vmem:[%s614 + $0x1b8] sm:$0xff]
        %v1270 = vld [vmem:[%s614 + $0x1c0] sm:$0xff]
        %v1271 = vld [vmem:[%s614 + $0x1c8] sm:$0xff]
        %v1272 = vld [vmem:[%s614 + $0x1d0] sm:$0xff]
        %v1273 = vld [vmem:[%s614 + $0x1d8] sm:$0xff]
        %v1274 = vld [vmem:[%s614 + $0x1e0] sm:$0xff]
        %v1275 = vld [vmem:[%s614 + $0x1e8] sm:$0xff]
        %v1276 = vld [vmem:[%s614 + $0x1f0] sm:$0xff]
        %v1277 = vld [vmem:[%s614 + $0x1f8] sm:$0xff]
        %v1342 = vunpack.c.l.b16 %v1214
        %v1343 = vunpack.c.h.b16 %v1214
        %v1344 = vunpack.c.l.b16 %v1215
        %v1345 = vunpack.c.h.b16 %v1215
        %v1346 = vunpack.c.l.b16 %v1216
        %v1347 = vunpack.c.h.b16 %v1216
        %v1348 = vunpack.c.l.b16 %v1217
        %v1349 = vunpack.c.h.b16 %v1217
        %v1350 = vunpack.c.l.b16 %v1218
        %v1351 = vunpack.c.h.b16 %v1218
        %v1352 = vunpack.c.l.b16 %v1219
        %v1353 = vunpack.c.h.b16 %v1219
        %v1354 = vunpack.c.l.b16 %v1220
        %v1355 = vunpack.c.h.b16 %v1220
        %v1356 = vunpack.c.l.b16 %v1221
        %v1357 = vunpack.c.h.b16 %v1221
        %v1358 = vunpack.c.l.b16 %v1222
        %v1359 = vunpack.c.h.b16 %v1222
        %v1360 = vunpack.c.l.b16 %v1223
        %v1361 = vunpack.c.h.b16 %v1223
        %v1362 = vunpack.c.l.b16 %v1224
        %v1363 = vunpack.c.h.b16 %v1224
        %v1364 = vunpack.c.l.b16 %v1225
        %v1365 = vunpack.c.h.b16 %v1225
        %v1366 = vunpack.c.l.b16 %v1226
        %v1367 = vunpack.c.h.b16 %v1226
        %v1368 = vunpack.c.l.b16 %v1227
        %v1369 = vunpack.c.h.b16 %v1227
        %v1370 = vunpack.c.l.b16 %v1228
        %v1371 = vunpack.c.h.b16 %v1228
        %v1372 = vunpack.c.l.b16 %v1229
        %v1373 = vunpack.c.h.b16 %v1229
        %v1374 = vunpack.c.l.b16 %v1230
        %v1375 = vunpack.c.h.b16 %v1230
        %v1376 = vunpack.c.l.b16 %v1231
        %v1377 = vunpack.c.h.b16 %v1231
        %v1378 = vunpack.c.l.b16 %v1232
        %v1379 = vunpack.c.h.b16 %v1232
        %v1380 = vunpack.c.l.b16 %v1233
        %v1381 = vunpack.c.h.b16 %v1233
        %v1382 = vunpack.c.l.b16 %v1234
        %v1383 = vunpack.c.h.b16 %v1234
        %v1384 = vunpack.c.l.b16 %v1235
        %v1385 = vunpack.c.h.b16 %v1235
        %v1386 = vunpack.c.l.b16 %v1236
        %v1387 = vunpack.c.h.b16 %v1236
        %v1388 = vunpack.c.l.b16 %v1237
        %v1389 = vunpack.c.h.b16 %v1237
        %v1390 = vunpack.c.l.b16 %v1238
        %v1391 = vunpack.c.h.b16 %v1238
        %v1392 = vunpack.c.l.b16 %v1239
        %v1393 = vunpack.c.h.b16 %v1239
        %v1394 = vunpack.c.l.b16 %v1240
        %v1395 = vunpack.c.h.b16 %v1240
        %v1396 = vunpack.c.l.b16 %v1241
        %v1397 = vunpack.c.h.b16 %v1241
        %v1398 = vunpack.c.l.b16 %v1242
        %v1399 = vunpack.c.h.b16 %v1242
        %v1400 = vunpack.c.l.b16 %v1243
        %v1401 = vunpack.c.h.b16 %v1243
        %v1402 = vunpack.c.l.b16 %v1244
        %v1403 = vunpack.c.h.b16 %v1244
        %v1404 = vunpack.c.l.b16 %v1245
        %v1405 = vunpack.c.h.b16 %v1245
        %v1406 = vunpack.c.l.b16 %v1246
        %v1407 = vunpack.c.h.b16 %v1246
        %v1408 = vunpack.c.l.b16 %v1247
        %v1409 = vunpack.c.h.b16 %v1247
        %v1410 = vunpack.c.l.b16 %v1248
        %v1411 = vunpack.c.h.b16 %v1248
        %v1412 = vunpack.c.l.b16 %v1249
        %v1413 = vunpack.c.h.b16 %v1249
        %v1414 = vunpack.c.l.b16 %v1250
        %v1415 = vunpack.c.h.b16 %v1250
        %v1416 = vunpack.c.l.b16 %v1251
        %v1417 = vunpack.c.h.b16 %v1251
        %v1418 = vunpack.c.l.b16 %v1252
        %v1419 = vunpack.c.h.b16 %v1252
        %v1420 = vunpack.c.l.b16 %v1253
        %v1421 = vunpack.c.h.b16 %v1253
        %v1422 = vunpack.c.l.b16 %v1254
        %v1423 = vunpack.c.h.b16 %v1254
        %v1424 = vunpack.c.l.b16 %v1255
        %v1425 = vunpack.c.h.b16 %v1255
        %v1426 = vunpack.c.l.b16 %v1256
        %v1427 = vunpack.c.h.b16 %v1256
        %v1428 = vunpack.c.l.b16 %v1257
        %v1429 = vunpack.c.h.b16 %v1257
        %v1430 = vunpack.c.l.b16 %v1258
        %v1431 = vunpack.c.h.b16 %v1258
        %v1432 = vunpack.c.l.b16 %v1259
        %v1433 = vunpack.c.h.b16 %v1259
        %v1434 = vunpack.c.l.b16 %v1260
        %v1435 = vunpack.c.h.b16 %v1260
        %v1436 = vunpack.c.l.b16 %v1261
        %v1437 = vunpack.c.h.b16 %v1261
        %v1438 = vunpack.c.l.b16 %v1262
        %v1439 = vunpack.c.h.b16 %v1262
        %v1440 = vunpack.c.l.b16 %v1263
        %v1441 = vunpack.c.h.b16 %v1263
        %v1442 = vunpack.c.l.b16 %v1264
        %v1443 = vunpack.c.h.b16 %v1264
        %v1444 = vunpack.c.l.b16 %v1265
        %v1445 = vunpack.c.h.b16 %v1265
        %v1446 = vunpack.c.l.b16 %v1266
        %v1447 = vunpack.c.h.b16 %v1266
        %v1448 = vunpack.c.l.b16 %v1267
        %v1449 = vunpack.c.h.b16 %v1267
        %v1450 = vunpack.c.l.b16 %v1268
        %v1451 = vunpack.c.h.b16 %v1268
        %v1452 = vunpack.c.l.b16 %v1269
        %v1453 = vunpack.c.h.b16 %v1269
        %v1454 = vunpack.c.l.b16 %v1270
        %v1455 = vunpack.c.h.b16 %v1270
        %v1456 = vunpack.c.l.b16 %v1271
        %v1457 = vunpack.c.h.b16 %v1271
        %v1458 = vunpack.c.l.b16 %v1272
        %v1459 = vunpack.c.h.b16 %v1272
        %v1460 = vunpack.c.l.b16 %v1273
        %v1461 = vunpack.c.h.b16 %v1273
        %v1462 = vunpack.c.l.b16 %v1274
        %v1463 = vunpack.c.h.b16 %v1274
        %v1464 = vunpack.c.l.b16 %v1275
        %v1465 = vunpack.c.h.b16 %v1275
        %v1466 = vunpack.c.l.b16 %v1276
        %v1467 = vunpack.c.h.b16 %v1276
        %v1468 = vunpack.c.l.b16 %v1277
        %v1469 = vunpack.c.h.b16 %v1277
        %v1470 = vpack.c.b16 %v1346, %v1342
        %v1471 = vpack.c.b16 %v1347, %v1343
        %v1472 = vpack.c.b16 %v1348, %v1344
        %v1473 = vpack.c.b16 %v1349, %v1345
        %v1474 = vpack.c.b16 %v1354, %v1350
        %v1475 = vpack.c.b16 %v1355, %v1351
        %v1476 = vpack.c.b16 %v1356, %v1352
        %v1477 = vpack.c.b16 %v1357, %v1353
        %v1478 = vpack.c.b16 %v1362, %v1358
        %v1479 = vpack.c.b16 %v1363, %v1359
        %v1480 = vpack.c.b16 %v1364, %v1360
        %v1481 = vpack.c.b16 %v1365, %v1361
        %v1482 = vpack.c.b16 %v1370, %v1366
        %v1483 = vpack.c.b16 %v1371, %v1367
        %v1484 = vpack.c.b16 %v1372, %v1368
        %v1485 = vpack.c.b16 %v1373, %v1369
        %v1486 = vpack.c.b16 %v1378, %v1374
        %v1487 = vpack.c.b16 %v1379, %v1375
        %v1488 = vpack.c.b16 %v1380, %v1376
        %v1489 = vpack.c.b16 %v1381, %v1377
        %v1490 = vpack.c.b16 %v1386, %v1382
        %v1491 = vpack.c.b16 %v1387, %v1383
        %v1492 = vpack.c.b16 %v1388, %v1384
        %v1493 = vpack.c.b16 %v1389, %v1385
        %v1494 = vpack.c.b16 %v1394, %v1390
        %v1495 = vpack.c.b16 %v1395, %v1391
        %v1496 = vpack.c.b16 %v1396, %v1392
        %v1497 = vpack.c.b16 %v1397, %v1393
        %v1498 = vpack.c.b16 %v1402, %v1398
        %v1499 = vpack.c.b16 %v1403, %v1399
        %v1500 = vpack.c.b16 %v1404, %v1400
        %v1501 = vpack.c.b16 %v1405, %v1401
        %v1502 = vpack.c.b16 %v1410, %v1406
        %v1503 = vpack.c.b16 %v1411, %v1407
        %v1504 = vpack.c.b16 %v1412, %v1408
        %v1505 = vpack.c.b16 %v1413, %v1409
        %v1506 = vpack.c.b16 %v1418, %v1414
        %v1507 = vpack.c.b16 %v1419, %v1415
        %v1508 = vpack.c.b16 %v1420, %v1416
        %v1509 = vpack.c.b16 %v1421, %v1417
        %v1510 = vpack.c.b16 %v1426, %v1422
        %v1511 = vpack.c.b16 %v1427, %v1423
        %v1512 = vpack.c.b16 %v1428, %v1424
        %v1513 = vpack.c.b16 %v1429, %v1425
        %v1514 = vpack.c.b16 %v1434, %v1430
        %v1515 = vpack.c.b16 %v1435, %v1431
        %v1516 = vpack.c.b16 %v1436, %v1432
        %v1517 = vpack.c.b16 %v1437, %v1433
        %v1518 = vpack.c.b16 %v1442, %v1438
        %v1519 = vpack.c.b16 %v1443, %v1439
        %v1520 = vpack.c.b16 %v1444, %v1440
        %v1521 = vpack.c.b16 %v1445, %v1441
        %v1522 = vpack.c.b16 %v1450, %v1446
        %v1523 = vpack.c.b16 %v1451, %v1447
        %v1524 = vpack.c.b16 %v1452, %v1448
        %v1525 = vpack.c.b16 %v1453, %v1449
        %v1526 = vpack.c.b16 %v1458, %v1454
        %v1527 = vpack.c.b16 %v1459, %v1455
        %v1528 = vpack.c.b16 %v1460, %v1456
        %v1529 = vpack.c.b16 %v1461, %v1457
        %v1530 = vpack.c.b16 %v1466, %v1462
        %v1531 = vpack.c.b16 %v1467, %v1463
        %v1532 = vpack.c.b16 %v1468, %v1464
        %v1533 = vpack.c.b16 %v1469, %v1465
        %1598 = vmatprep.subr.bf16.mxu0 %v1471
        %1599 = vmatpush1.bf16.msra.mxu0 %v1470
        %1600 = vmatprep.subr.bf16.mxu0 %v1475
        %1601 = vmatpush1.bf16.msra.mxu0 %v1474
        %1602 = vmatprep.subr.bf16.mxu0 %v1479
        %1603 = vmatpush1.bf16.msra.mxu0 %v1478
        %1604 = vmatprep.subr.bf16.mxu0 %v1483
        %1605 = vmatpush1.bf16.msra.mxu0 %v1482
        %1606 = vmatprep.subr.bf16.mxu0 %v1487
        %1607 = vmatpush1.bf16.msra.mxu0 %v1486
        %1608 = vmatprep.subr.bf16.mxu0 %v1491
        %1609 = vmatpush1.bf16.msra.mxu0 %v1490
        %1610 = vmatprep.subr.bf16.mxu0 %v1495
        %1611 = vmatpush1.bf16.msra.mxu0 %v1494
        %1612 = vmatprep.subr.bf16.mxu0 %v1499
        %1613 = vmatpush1.bf16.msra.mxu0 %v1498
        %1614 = vmatprep.subr.bf16.mxu0 %v1503
        %1615 = vmatpush1.bf16.msra.mxu0 %v1502
        %1616 = vmatprep.subr.bf16.mxu0 %v1507
        %1617 = vmatpush1.bf16.msra.mxu0 %v1506
        %1618 = vmatprep.subr.bf16.mxu0 %v1511
        %1619 = vmatpush1.bf16.msra.mxu0 %v1510
        %1620 = vmatprep.subr.bf16.mxu0 %v1515
        %1621 = vmatpush1.bf16.msra.mxu0 %v1514
        %1622 = vmatprep.subr.bf16.mxu0 %v1519
        %1623 = vmatpush1.bf16.msra.mxu0 %v1518
        %1624 = vmatprep.subr.bf16.mxu0 %v1523
        %1625 = vmatpush1.bf16.msra.mxu0 %v1522
        %1626 = vmatprep.subr.bf16.mxu0 %v1527
        %1627 = vmatpush1.bf16.msra.mxu0 %v1526
        %1628 = vmatprep.subr.bf16.mxu0 %v1531
        %1629 = vmatpush1.bf16.msra.mxu0 %v1530
        %1630 = vmatprep.mubr.bf16.mxu0 %v1213
        %1631 = vmatmul.mubr.bf16.gmra.mrb[0].mxu0 %v1212
        %v1632 = vpop.f32.mrb[0].mxu0
        %v1633 = vadd.f32 0.0, %v1632
        %v1634 = vpop.f32.mrb[0].mxu0
        %v1635 = vadd.f32 0.0, %v1634
        %v1636 = vpop.f32.mrb[0].mxu0
        %v1637 = vpop.f32.mrb[0].mxu0
        %1638 = vdwg.mxu0
        %1639 = vmatprep.subr.bf16.mxu0 %v1473
        %1640 = vmatpush1.bf16.msra.mxu0 %v1472
        %1641 = vmatprep.subr.bf16.mxu0 %v1477
        %1642 = vmatpush1.bf16.msra.mxu0 %v1476
        %1643 = vmatprep.subr.bf16.mxu0 %v1481
        %1644 = vmatpush1.bf16.msra.mxu0 %v1480
        %1645 = vmatprep.subr.bf16.mxu0 %v1485
        %1646 = vmatpush1.bf16.msra.mxu0 %v1484
        %1647 = vmatprep.subr.bf16.mxu0 %v1489
        %1648 = vmatpush1.bf16.msra.mxu0 %v1488
        %1649 = vmatprep.subr.bf16.mxu0 %v1493
        %1650 = vmatpush1.bf16.msra.mxu0 %v1492
        %1651 = vmatprep.subr.bf16.mxu0 %v1497
        %1652 = vmatpush1.bf16.msra.mxu0 %v1496
        %1653 = vmatprep.subr.bf16.mxu0 %v1501
        %1654 = vmatpush1.bf16.msra.mxu0 %v1500
        %1655 = vmatprep.subr.bf16.mxu0 %v1505
        %1656 = vmatpush1.bf16.msra.mxu0 %v1504
        %1657 = vmatprep.subr.bf16.mxu0 %v1509
        %1658 = vmatpush1.bf16.msra.mxu0 %v1508
        %1659 = vmatprep.subr.bf16.mxu0 %v1513
        %1660 = vmatpush1.bf16.msra.mxu0 %v1512
        %1661 = vmatprep.subr.bf16.mxu0 %v1517
        %1662 = vmatpush1.bf16.msra.mxu0 %v1516
        %1663 = vmatprep.subr.bf16.mxu0 %v1521
        %1664 = vmatpush1.bf16.msra.mxu0 %v1520
        %1665 = vmatprep.subr.bf16.mxu0 %v1525
        %1666 = vmatpush1.bf16.msra.mxu0 %v1524
        %1667 = vmatprep.subr.bf16.mxu0 %v1529
        %1668 = vmatpush1.bf16.msra.mxu0 %v1528
        %1669 = vmatprep.subr.bf16.mxu0 %v1533
        %1670 = vmatpush1.bf16.msra.mxu0 %v1532
        %1671 = vmatprep.mubr.bf16.mxu0 %v1213
        %1672 = vmatmul.mubr.bf16.gmra.mrb[0].mxu0 %v1212
        %v1673 = vpop.f32.mrb[0].mxu0
        %v1674 = vadd.f32 0.0, %v1673
        %v1675 = vpop.f32.mrb[0].mxu0
        %v1676 = vadd.f32 0.0, %v1675
        %v1677 = vpop.f32.mrb[0].mxu0
        %v1678 = vpop.f32.mrb[0].mxu0
        %1679 = vdwg.mxu0
        %v1680 = vadd.f32 %v1208, %v1633
        %v1681 = vadd.f32 %v1209, %v1635
        %v1682 = vadd.f32 %v1210, %v1674
        %v1683 = vadd.f32 %v1211, %v1676
        %1684 = vst [vmem:[#allocation2] sm:$0xff] %v1680
        %1685 = vst [vmem:[#allocation2 + $0x8] sm:$0xff] %v1681
        %1686 = vst [vmem:[#allocation2 + $0x10] sm:$0xff] %v1682
        %1687 = vst [vmem:[#allocation2 + $0x18] sm:$0xff] %v1683
        %p1688 = scmp.eq.s32.totalorder %s19, 1
        // Predicated region
        $region91: #{resblock_forward.1} parent=81 // pred_check
          %p1689 = pneg %p1688
        $region92: #{resblock_forward.1} parent=81 // pred_check_branch
          %1691 = sbr.rel (%p1689) target = $region94
        $region93: #{resblock_forward.1} parent=81 // pred_region
          %v1692 = vld [vmem:[#allocation2] sm:$0xff]
          %v1693 = vld [vmem:[#allocation2 + $0x8] sm:$0xff]
          %v1694 = vld [vmem:[#allocation2 + $0x10] sm:$0xff]
          %v1695 = vld [vmem:[#allocation2 + $0x18] sm:$0xff]
          %v1696 = vrot.slane %v1692, 4
          %v1697 = vadd.f32 %v1692, %v1696
          %v1698 = vrot.slane %v1697, 2
          %v1699 = vadd.f32 %v1697, %v1698
          %v1700 = vrot.slane %v1699, 1
          %v1701 = vadd.f32 %v1699, %v1700
          %v1702 = vrot.slane %v1693, 4
          %v1703 = vadd.f32 %v1693, %v1702
          %v1704 = vrot.slane %v1703, 2
          %v1705 = vadd.f32 %v1703, %v1704
          %v1706 = vrot.slane %v1705, 1
          %v1707 = vadd.f32 %v1705, %v1706
          %v1708 = vrot.slane %v1694, 4
          %v1709 = vadd.f32 %v1694, %v1708
          %v1710 = vrot.slane %v1709, 2
          %v1711 = vadd.f32 %v1709, %v1710
          %v1712 = vrot.slane %v1711, 1
          %v1713 = vadd.f32 %v1711, %v1712
          %v1714 = vrot.slane %v1695, 4
          %v1715 = vadd.f32 %v1695, %v1714
          %v1716 = vrot.slane %v1715, 2
          %v1717 = vadd.f32 %v1715, %v1716
          %v1718 = vrot.slane %v1717, 1
          %v1719 = vadd.f32 %v1717, %v1718
          %v1720 = vmul.f32 %v1701, 0.125
          %v1721 = vmul.f32 %v1707, 0.125
          %v1722 = vmul.f32 %v1713, 0.125
          %v1723 = vmul.f32 %v1719, 0.125
          %v1724 = vmul.f32 %v1692, %v1692
          %v1725 = vmul.f32 %v1693, %v1693
          %v1726 = vmul.f32 %v1694, %v1694
          %v1727 = vmul.f32 %v1695, %v1695
          %v1728 = vrot.slane %v1724, 4
          %v1729 = vadd.f32 %v1724, %v1728
          %v1730 = vrot.slane %v1729, 2
          %v1731 = vadd.f32 %v1729, %v1730
          %v1732 = vrot.slane %v1731, 1
          %v1733 = vadd.f32 %v1731, %v1732
          %v1734 = vrot.slane %v1725, 4
          %v1735 = vadd.f32 %v1725, %v1734
          %v1736 = vrot.slane %v1735, 2
          %v1737 = vadd.f32 %v1735, %v1736
          %v1738 = vrot.slane %v1737, 1
          %v1739 = vadd.f32 %v1737, %v1738
          %v1740 = vrot.slane %v1726, 4
          %v1741 = vadd.f32 %v1726, %v1740
          %v1742 = vrot.slane %v1741, 2
          %v1743 = vadd.f32 %v1741, %v1742
          %v1744 = vrot.slane %v1743, 1
          %v1745 = vadd.f32 %v1743, %v1744
          %v1746 = vrot.slane %v1727, 4
          %v1747 = vadd.f32 %v1727, %v1746
          %v1748 = vrot.slane %v1747, 2
          %v1749 = vadd.f32 %v1747, %v1748
          %v1750 = vrot.slane %v1749, 1
          %v1751 = vadd.f32 %v1749, %v1750
          %v1752 = vmul.f32 %v1733, 0.125
          %v1753 = vmul.f32 %v1739, 0.125
          %v1754 = vmul.f32 %v1745, 0.125
          %v1755 = vmul.f32 %v1751, 0.125
          %v1756 = vmul.f32 %v1720, %v1720
          %v1757 = vmul.f32 %v1721, %v1721
          %v1758 = vmul.f32 %v1722, %v1722
          %v1759 = vmul.f32 %v1723, %v1723
          %v1760 = vsub.f32 %v1752, %v1756
          %v1761 = vsub.f32 %v1753, %v1757
          %v1762 = vsub.f32 %v1754, %v1758
          %v1763 = vsub.f32 %v1755, %v1759
          %v1764 = vmax.f32 %v1760, 0.0
          %v1765 = vmax.f32 %v1761, 0.0
          %v1766 = vmax.f32 %v1762, 0.0
          %v1767 = vmax.f32 %v1763, 0.0
          %v1768 = vld [vmem:[%s5] sm:$0xf]
          %v1769 = vadd.f32 %v1764, 1e-05
          %v1770 = vadd.f32 %v1765, 1e-05
          %v1771 = vadd.f32 %v1766, 1e-05
          %v1772 = vadd.f32 %v1767, 1e-05
          %v1773 = vrsqrt.pop %v1769
          %v1774 = vrsqrt.pop %v1770
          %v1775 = vrsqrt.pop %v1771
          %v1776 = vrsqrt.pop %v1772
          %v1781 = vcombine.low %v1773, %v1774
          %v1782 = vcombine.low %v1775, %v1776
          %v1784 = vunpack.c.l.s4 1966171168
          %v1785 = vunpack.c.0.s8 %v1784
          %v1786 = vlaneseq
          %v1787 = vshrl.u32 %v1786, 7
          %v1788 = vsub.s32 %v1785, %v1787
          %v1789 = vrot.slane %v1781, %v1788
          %v1791 = vunpack.c.l.s4 1966171168
          %v1792 = vunpack.c.0.s8 %v1791
          %v1793 = vlaneseq
          %v1794 = vshrl.u32 %v1793, 7
          %v1795 = vsub.s32 %v1792, %v1794
          %v1796 = vrot.slane %v1782, %v1795
          %v1797 = vcombine.low %v1789, %v1796
          %v1799 = vunpack.c.l.s4 1966171168
          %v1800 = vunpack.c.0.s8 %v1799
          %v1801 = vlaneseq
          %v1802 = vshrl.u32 %v1801, 7
          %v1803 = vsub.s32 %v1800, %v1802
          %v1804 = vrot.slane %v1797, %v1803
          %v1806 = vmul.f32 %v1768, %v1804
          %v1807 = vld [vmem:[%s6] sm:$0xf]
          %v1809 = vlaneseq
          %v1810 = vshrl.u32 %v1809, 7
          %v1811 = vsub.s32 0, %v1810
          %v1812 = vrot.slane %v1806, %v1811
          %v1813 = vlaneseq
          %v1814 = vshrl.u32 %v1813, 7
          %v1815 = vsub.s32 1, %v1814
          %v1816 = vrot.slane %v1806, %v1815
          %v1817 = vlaneseq
          %v1818 = vshrl.u32 %v1817, 7
          %v1819 = vsub.s32 2, %v1818
          %v1820 = vrot.slane %v1806, %v1819
          %v1821 = vlaneseq
          %v1822 = vshrl.u32 %v1821, 7
          %v1823 = vsub.s32 3, %v1822
          %v1824 = vrot.slane %v1806, %v1823
          %v1829 = vmul.f32 %v1720, %v1812
          %v1830 = vmul.f32 %v1721, %v1816
          %v1831 = vmul.f32 %v1722, %v1820
          %v1832 = vmul.f32 %v1723, %v1824
          %v1837 = vcombine.low %v1829, %v1830
          %v1838 = vcombine.low %v1831, %v1832
          %v1840 = vunpack.c.l.s4 1966171168
          %v1841 = vunpack.c.0.s8 %v1840
          %v1842 = vlaneseq
          %v1843 = vshrl.u32 %v1842, 7
          %v1844 = vsub.s32 %v1841, %v1843
          %v1845 = vrot.slane %v1837, %v1844
          %v1847 = vunpack.c.l.s4 1966171168
          %v1848 = vunpack.c.0.s8 %v1847
          %v1849 = vlaneseq
          %v1850 = vshrl.u32 %v1849, 7
          %v1851 = vsub.s32 %v1848, %v1850
          %v1852 = vrot.slane %v1838, %v1851
          %v1853 = vcombine.low %v1845, %v1852
          %v1855 = vunpack.c.l.s4 1966171168
          %v1856 = vunpack.c.0.s8 %v1855
          %v1857 = vlaneseq
          %v1858 = vshrl.u32 %v1857, 7
          %v1859 = vsub.s32 %v1856, %v1858
          %v1860 = vrot.slane %v1853, %v1859
          %v1862 = vsub.f32 %v1807, %v1860
          %v1863 = vmul.f32 %v1692, %v1812
          %v1864 = vmul.f32 %v1693, %v1816
          %v1865 = vmul.f32 %v1694, %v1820
          %v1866 = vmul.f32 %v1695, %v1824
          %v1868 = vlaneseq
          %v1869 = vshrl.u32 %v1868, 7
          %v1870 = vsub.s32 0, %v1869
          %v1871 = vrot.slane %v1862, %v1870
          %v1872 = vlaneseq
          %v1873 = vshrl.u32 %v1872, 7
          %v1874 = vsub.s32 1, %v1873
          %v1875 = vrot.slane %v1862, %v1874
          %v1876 = vlaneseq
          %v1877 = vshrl.u32 %v1876, 7
          %v1878 = vsub.s32 2, %v1877
          %v1879 = vrot.slane %v1862, %v1878
          %v1880 = vlaneseq
          %v1881 = vshrl.u32 %v1880, 7
          %v1882 = vsub.s32 3, %v1881
          %v1883 = vrot.slane %v1862, %v1882
          %v1888 = vadd.f32 %v1863, %v1871
          %v1889 = vadd.f32 %v1864, %v1875
          %v1890 = vadd.f32 %v1865, %v1879
          %v1891 = vadd.f32 %v1866, %v1883
          %v1892 = vadd.f32 %v1888, %v624
          %v1893 = vadd.f32 %v1889, %v625
          %v1894 = vadd.f32 %v1890, %v626
          %v1895 = vadd.f32 %v1891, %v627
          %v1896 = vmax.f32 %v1892, 0.0
          %v1897 = vmax.f32 %v1893, 0.0
          %v1898 = vmax.f32 %v1894, 0.0
          %v1899 = vmax.f32 %v1895, 0.0
          %1900 = vst [vmem:[#allocation4] sm:$0xff] %v1896
          %1901 = vst [vmem:[#allocation4 + $0x8] sm:$0xff] %v1897
          %1902 = vst [vmem:[#allocation4 + $0x10] sm:$0xff] %v1898
          %1903 = vst [vmem:[#allocation4 + $0x18] sm:$0xff] %v1899
        $region94: #{resblock_forward.1} parent=81 // pred_fallthru
          _
        // Predicated region
        $region95: #{resblock_forward.1} parent=81 // pred_check
          %p1904 = pneg %p199
        $region96: #{resblock_forward.1} parent=81 // pred_check_branch
          %1906 = sbr.rel (%p1904) target = $region98
        $region97: #{resblock_forward.1} parent=81 // pred_region
          %s1908 = ssub.s32 512, 512
          %1909 = vsyncadd [#allocation5], %s1908
          %s1911 = sshll.u32 [#allocation4], 4
          %s1912 = int_to_ptr.vmem [resolvable:$true] %s1911
          %1914 = dma.vmem_to_hbm [thread:$0]  %s1912, 512, %s7, [#allocation5]
        $region98: #{resblock_forward.1} parent=81 // pred_fallthru
          _
        // Predicated region
        $region99: #{resblock_forward.1} parent=81 // pred_check
          %p1915 = pneg %p199
        $region100: #{resblock_forward.1} parent=81 // pred_check_branch
          %1917 = sbr.rel (%p1915) target = $region102
        $region101: #{resblock_forward.1} parent=81 // pred_region
          %1918 = dma.done [#allocation5], 512
        $region102: #{resblock_forward.1} parent=81 // pred_fallthru
          _
      $region82: #{resblock_forward.1} parent=5 // pred_fallthru
        _
      %p1919 = scmp.le.s32.totalorder 2, %s14
      // Predicated region
      $region103: #{resblock_forward.1} parent=5 // pred_check
        %p1920 = pneg %p1919
      $region104: #{resblock_forward.1} parent=5 // pred_check_branch
        %1922 = sbr.rel (%p1920) target = $region106
      $region105: #{resblock_forward.1} parent=5 // pred_region
        %s1923 = ssub.s32 %s14, 2
      $region106: #{resblock_forward.1} parent=5 // pred_fallthru
        _
    $region6: #{resblock_forward.1} parent=1 // loop_footer
      %s18 = sadd.s32 1, %s14
    $region7: #{resblock_forward.1} parent=1 // loop_footer_branch
      %13 = sbr.rel target = $region3
    $region8: #{resblock_forward.1} parent=1 // loop_exit
      _
    %1924 = vsyncpa [#allocation5], 1
    %s1925 = scalar_lea.sflag [#allocation5], 1
    %1926 = vsyncpa %s1925, 1

</llo_original>
